<compile_context>
chip_gen: v5e
topology: v5e:2x2
jax: 0.10.0
libtpu: 0.0.40
codegen_flags: <defaults>
</compile_context>

<pallas_src>
import functools
import jax
import jax.numpy as jnp
from jax.experimental import pallas as pl
from jax.experimental.pallas import tpu as pltpu

_CH_PAD = 8      # RGB (3) zero-padded to 8 (sublane multiple), not 128
_LANE = 128      # lane-dense padding for the decoder output channels (n_classes -> 128)


# ----------------------------------------------------------------------------
# Single fused kernel: encoder 1x1 conv -> decoder 1x1 conv (pre-applied) ->
# query_key_net + key_net + query_net -> attention linear + softmax -> value fusion.
# One grid step == one batch element.
# ----------------------------------------------------------------------------

def _fused_kernel(x_ref, g_ref,
                  we_ref, be_ref,
                  wqk_ref, bqk_ref,
                  kw1_ref, kb1_ref, kw2_ref, kb2_ref, kw3_ref, kb3_ref,
                  qw1_ref, qb1_ref, qw2_ref, qb2_ref, qw3_ref, qb3_ref,
                  wl_ref, bl_ref,
                  wd_ref, bd_ref,
                  attn_ref, pred_ref,
                  *, A, S):
    f32 = jnp.float32
    bf16 = jnp.bfloat16

    def lin(x, w_ref, b_ref, relu):
        y = jnp.dot(x.astype(bf16), w_ref[...], preferred_element_type=f32) + b_ref[...]
        return jnp.maximum(y, 0.0) if relu else y

    # ---- u_encoder stand-in: 1x1 conv (8->C) + ReLU, channel-last ----
    feat = lin(x_ref[0], we_ref, be_ref, True)                          # (A*S, C) f32

    # ---- decoder-first: 1x1-conv decoder applied BEFORE attention mixing ----
    # (linear; bias deferred until after mixing, so result == decoder(sum_a attn*v)
    #  independent of the softmax normalization)
    vdec = jnp.dot(feat.astype(bf16), wd_ref[...],
                   preferred_element_type=f32)                          # (A*S, 128) f32

    # ---- query_key_net stand-in + km_generator key_net / query_net ----
    h0 = lin(g_ref[0], wqk_ref, bqk_ref, True)                          # (A, n_feat)
    hk = lin(h0, kw1_ref, kb1_ref, True)
    hk = lin(hk, kw2_ref, kb2_ref, True)
    keys = lin(hk, kw3_ref, kb3_ref, False)                             # (A, Dk)
    hq = lin(h0, qw1_ref, qb1_ref, True)
    hq = lin(hq, qw2_ref, qb2_ref, True)
    querys = lin(hq, qw3_ref, qb3_ref, False)                           # (A, Dq)

    # ---- attention: linear(query) . key^T, softmax over keys (f32 VPU/EUP) ----
    qlin = lin(querys, wl_ref, bl_ref, False)                           # (A, Dk)
    scores = jax.lax.dot_general(qlin.astype(bf16), keys.astype(bf16),
                                 (((1,), (1,)), ((), ())),
                                 preferred_element_type=f32)            # (Q=A, A)
    scores = scores - jnp.max(scores, axis=-1, keepdims=True)
    e = jnp.exp(scores)
    # approx reciprocal -> rows sum to ~1 (not bitwise 1); argmax/action unaffected and
    # the decoder result is exact because its bias is added after mixing.
    attn = e * pl.reciprocal(jnp.sum(e, axis=-1, keepdims=True), approx=True)
    attn_ref[0] = attn                                                  # (A, A)

    # ---- attention-weighted fusion of the already-decoded values (VPU MACs) ----
    acc = jnp.zeros((A, S, _LANE), f32)
    for a in range(A):                       # A is tiny & static: unrolled broadcast-MACs
        v_a = vdec[a * S:(a + 1) * S, :]                                # (S, 128), 8-aligned
        acc = acc + attn[:, a][:, None, None] * v_a[None, :, :]
    pred_ref[0] = acc + bd_ref[...][None, :, :]                         # (A, S, 128)


def _mimocom_pallas(x_enc, gpool, params, *, A, S):
    B = x_enc.shape[0]
    we, be = params["enc"]
    wqk, bqk = params["qk"]
    (kw1, kb1), (kw2, kb2), (kw3, kb3) = params["key_net"]
    (qw1, qb1), (qw2, qb2), (qw3, qb3) = params["query_net"]
    wl, bl = params["attn"]
    wd, bd = params["dec"]

    consts = [we, be, wqk, bqk, kw1, kb1, kw2, kb2, kw3, kb3,
              qw1, qb1, qw2, qb2, qw3, qb3, wl, bl, wd, bd]

    def const_spec(a):
        nd = a.ndim
        return pl.BlockSpec(a.shape, lambda b, _n=nd: (0,) * _n)   # fetched once (block idx const)

    in_specs = ([pl.BlockSpec((1, A * S, _CH_PAD), lambda b: (b, 0, 0)),
                 pl.BlockSpec((1, A, _CH_PAD), lambda b: (b, 0, 0))]
                + [const_spec(a) for a in consts])

    kernel = functools.partial(_fused_kernel, A=A, S=S)
    attn_out, pred_out = pl.pallas_call(
        kernel,
        out_shape=(jax.ShapeDtypeStruct((B, A, A), jnp.float32),
                   jax.ShapeDtypeStruct((B, A, S, _LANE), jnp.float32)),
        grid=(B,),
        in_specs=in_specs,
        out_specs=(pl.BlockSpec((1, A, A), lambda b: (b, 0, 0)),
                   pl.BlockSpec((1, A, S, _LANE), lambda b: (b, 0, 0, 0))),
        compiler_params=pltpu.CompilerParams(dimension_semantics=("parallel",)),
    )(x_enc, gpool, *consts)
    return attn_out, pred_out


# ----------------------------------------------------------------------------
# MIMOcom forward (glue in plain JAX)
# ----------------------------------------------------------------------------

class Config:
    agent_num = 5
    in_channels = 3
    image_size = 128
    feature_map_channel = 512
    key_size = 128
    query_size = 128
    n_classes = 21


def init_params(key, cfg):
    n_feat = int(256 * ((cfg.image_size / 32) // 4) ** 2)   # km_generator n_feat
    keys = iter(jax.random.split(key, 40))

    def lin(fan_in, fan_out, scale=0.05):
        w = jax.random.normal(next(keys), (fan_in, fan_out), jnp.float32) * scale
        b = jax.random.normal(next(keys), (fan_out,), jnp.float32) * scale
        # bf16 MXU operands (halves weight DMA); biases stay f32, shaped (1, N)
        return w.astype(jnp.bfloat16), b.reshape(1, -1)

    params = {}
    params["enc"] = lin(_CH_PAD, cfg.feature_map_channel)    # u_encoder stand-in (1x1 conv)
    params["qk"] = lin(_CH_PAD, n_feat)                      # query_key_net stand-in
    params["key_net"] = [lin(n_feat, 256), lin(256, 128), lin(128, cfg.key_size)]
    params["query_net"] = [lin(n_feat, 256), lin(256, 128), lin(128, cfg.query_size)]
    params["attn"] = lin(cfg.query_size, cfg.key_size)       # attention_net.linear
    # decoder stand-in, zero-padded to 128 output lanes at init (no per-call pad op)
    wd, bd = lin(cfg.feature_map_channel, cfg.n_classes)
    params["dec"] = (jnp.pad(wd, ((0, 0), (0, _LANE - cfg.n_classes))),
                     jnp.pad(bd, ((0, 0), (0, _LANE - cfg.n_classes))))
    return params


def mimocom_forward(inputs, params, cfg, training=True, MO_flag=True):
    B = inputs.shape[0]
    A = cfg.agent_num
    H, W = inputs.shape[2], inputs.shape[3]
    Hf, Wf = H // 32, W // 32
    S = Hf * Wf

    # divide_inputs: (B, 3*A, H, W) -> per-agent RGB, batch-major row order (b, a).
    per_agent = inputs.reshape(B, A, 3, H, W)

    # TODO(synk): n_segnet_encoder / n_segnet_decoder / conv2DBatchNormRelu / policy_net4
    # backbones are not in the provided source; stand-ins = 32x32 avg-pool (encoder) and
    # global avg-pool (policy) feeding 1x1 convs that run inside the fused Pallas kernel.
    pooled = per_agent.reshape(B, A, 3, Hf, 32, Wf, 32).mean(axis=(4, 6))   # (B,A,3,Hf,Wf)
    x_enc = pooled.transpose(0, 1, 3, 4, 2).reshape(B, A * S, 3)            # channel-last
    x_enc = jnp.pad(x_enc, ((0, 0), (0, 0), (0, _CH_PAD - 3))).astype(jnp.bfloat16)
    # gpool from the already-pooled tensor (uniform exact-tiling windows -> identical)
    gpool = pooled.mean(axis=(3, 4))                                        # (B, A, 3)
    gpool = jnp.pad(gpool, ((0, 0), (0, 0), (0, _CH_PAD - 3))).astype(jnp.bfloat16)

    attn_out, pred_out = _mimocom_pallas(x_enc, gpool, params, A=A, S=S)

    # kernel always evaluates all A queries; MO_flag=False just uses query 0
    Q = A if MO_flag else 1
    prob_action = jnp.transpose(attn_out[:, :Q, :A], (0, 2, 1))             # (B, A, Q)

    # pred_out: (B, A, S, 128) ordered (b, q, (hf,wf), class-lane); agents2batch ordering
    pred5 = pred_out[:, :Q, :, :cfg.n_classes].reshape(B, Q, Hf, Wf, cfg.n_classes)
    pred = jnp.transpose(pred5, (1, 0, 4, 2, 3)).reshape(Q * B, cfg.n_classes, Hf, Wf)

    # ---- small identity bias + action (training / softmax path) ----
    if prob_action.shape[1] == prob_action.shape[2]:   # original only valid when Q == A
        small_bis = jnp.eye(prob_action.shape[1], dtype=jnp.float32)[None] * 0.001
        prob_action = prob_action + small_bis
    action = jnp.argmax(prob_action, axis=1)
    num_connect = A - 1
    return pred, prob_action, action, num_connect


# ----------------------------------------------------------------------------

if __name__ == "__main__":
    cfg = Config()
    root = jax.random.PRNGKey(0)
    k_params, k_inputs = jax.random.split(root)
    params = init_params(k_params, cfg)
    # inputs: (B, 3*agent_num, H, W) — NCHW, agents concatenated along channels
    inputs = jax.random.normal(
        k_inputs, (2, 3 * cfg.agent_num, cfg.image_size, cfg.image_size), jnp.float32)

    fwd = jax.jit(functools.partial(mimocom_forward, cfg=cfg, training=True, MO_flag=True))
    pred, prob_action, action, num_connect = fwd(inputs, params)
    jax.block_until_ready((pred, prob_action, action))

    assert pred.shape == (cfg.agent_num * 2, cfg.n_classes,
                          cfg.image_size // 32, cfg.image_size // 32)
    assert prob_action.shape == (2, cfg.agent_num, cfg.agent_num)
    assert action.shape == (2, cfg.agent_num)
    print("KERNEL_OK")
</pallas_src>

<mosaic_0001>
module attributes {stable_mosaic.version = 11 : i64} {
  func.func @_fused_kernel(%arg0: i32, %arg1: memref<1x80x8xbf16, #tpu.memory_space<vmem>>, %arg2: memref<1x5x8xbf16, #tpu.memory_space<vmem>>, %arg3: memref<8x512xbf16, #tpu.memory_space<vmem>>, %arg4: memref<1x512xf32, #tpu.memory_space<vmem>>, %arg5: memref<8x256xbf16, #tpu.memory_space<vmem>>, %arg6: memref<1x256xf32, #tpu.memory_space<vmem>>, %arg7: memref<256x256xbf16, #tpu.memory_space<vmem>>, %arg8: memref<1x256xf32, #tpu.memory_space<vmem>>, %arg9: memref<256x128xbf16, #tpu.memory_space<vmem>>, %arg10: memref<1x128xf32, #tpu.memory_space<vmem>>, %arg11: memref<128x128xbf16, #tpu.memory_space<vmem>>, %arg12: memref<1x128xf32, #tpu.memory_space<vmem>>, %arg13: memref<256x256xbf16, #tpu.memory_space<vmem>>, %arg14: memref<1x256xf32, #tpu.memory_space<vmem>>, %arg15: memref<256x128xbf16, #tpu.memory_space<vmem>>, %arg16: memref<1x128xf32, #tpu.memory_space<vmem>>, %arg17: memref<128x128xbf16, #tpu.memory_space<vmem>>, %arg18: memref<1x128xf32, #tpu.memory_space<vmem>>, %arg19: memref<128x128xbf16, #tpu.memory_space<vmem>>, %arg20: memref<1x128xf32, #tpu.memory_space<vmem>>, %arg21: memref<512x128xbf16, #tpu.memory_space<vmem>>, %arg22: memref<1x128xf32, #tpu.memory_space<vmem>>, %arg23: memref<1x5x5xf32, #tpu.memory_space<vmem>>, %arg24: memref<1x5x16x128xf32, #tpu.memory_space<vmem>>) attributes {dimension_semantics = [#tpu.dimension_semantics<parallel>], iteration_bounds = array<i64: 2>, scalar_prefetch = 0 : i64, scratch_operands = 0 : i64, tpu.core_type = #tpu.core_type<tc>, window_params = [{transform_indices = @transform_0, window_bounds = array<i64: 1, 80, 8>}, {transform_indices = @transform_1, window_bounds = array<i64: 1, 5, 8>}, {pipeline_mode = #tpu.pipeline_mode<synchronous>, transform_indices = @transform_2, window_bounds = array<i64: 8, 512>}, {pipeline_mode = #tpu.pipeline_mode<synchronous>, transform_indices = @transform_3, window_bounds = array<i64: 1, 512>}, {pipeline_mode = #tpu.pipeline_mode<synchronous>, transform_indices = @transform_4, window_bounds = array<i64: 8, 256>}, {pipeline_mode = #tpu.pipeline_mode<synchronous>, transform_indices = @transform_5, window_bounds = array<i64: 1, 256>}, {pipeline_mode = #tpu.pipeline_mode<synchronous>, transform_indices = @transform_6, window_bounds = array<i64: 256, 256>}, {pipeline_mode = #tpu.pipeline_mode<synchronous>, transform_indices = @transform_7, window_bounds = array<i64: 1, 256>}, {pipeline_mode = #tpu.pipeline_mode<synchronous>, transform_indices = @transform_8, window_bounds = array<i64: 256, 128>}, {pipeline_mode = #tpu.pipeline_mode<synchronous>, transform_indices = @transform_9, window_bounds = array<i64: 1, 128>}, {pipeline_mode = #tpu.pipeline_mode<synchronous>, transform_indices = @transform_10, window_bounds = array<i64: 128, 128>}, {pipeline_mode = #tpu.pipeline_mode<synchronous>, transform_indices = @transform_11, window_bounds = array<i64: 1, 128>}, {pipeline_mode = #tpu.pipeline_mode<synchronous>, transform_indices = @transform_12, window_bounds = array<i64: 256, 256>}, {pipeline_mode = #tpu.pipeline_mode<synchronous>, transform_indices = @transform_13, window_bounds = array<i64: 1, 256>}, {pipeline_mode = #tpu.pipeline_mode<synchronous>, transform_indices = @transform_14, window_bounds = array<i64: 256, 128>}, {pipeline_mode = #tpu.pipeline_mode<synchronous>, transform_indices = @transform_15, window_bounds = array<i64: 1, 128>}, {pipeline_mode = #tpu.pipeline_mode<synchronous>, transform_indices = @transform_16, window_bounds = array<i64: 128, 128>}, {pipeline_mode = #tpu.pipeline_mode<synchronous>, transform_indices = @transform_17, window_bounds = array<i64: 1, 128>}, {pipeline_mode = #tpu.pipeline_mode<synchronous>, transform_indices = @transform_18, window_bounds = array<i64: 128, 128>}, {pipeline_mode = #tpu.pipeline_mode<synchronous>, transform_indices = @transform_19, window_bounds = array<i64: 1, 128>}, {pipeline_mode = #tpu.pipeline_mode<synchronous>, transform_indices = @transform_20, window_bounds = array<i64: 512, 128>}, {pipeline_mode = #tpu.pipeline_mode<synchronous>, transform_indices = @transform_21, window_bounds = array<i64: 1, 128>}, {transform_indices = @transform_22, window_bounds = array<i64: 1, 5, 5>}, {transform_indices = @transform_23, window_bounds = array<i64: 1, 5, 16, 128>}]} {
    %c0 = arith.constant 0 : index
    %c0_0 = arith.constant 0 : index
    %c0_1 = arith.constant 0 : index
    %0 = vector.load %arg1[%c0, %c0_0, %c0_1] : memref<1x80x8xbf16, #tpu.memory_space<vmem>>, vector<1x80x8xbf16>
    %1 = vector.shape_cast %0 : vector<1x80x8xbf16> to vector<80x8xbf16>
    %c0_2 = arith.constant 0 : index
    %c0_3 = arith.constant 0 : index
    %2 = vector.load %arg3[%c0_2, %c0_3] : memref<8x512xbf16, #tpu.memory_space<vmem>>, vector<8x512xbf16>
    %cst = arith.constant dense<0.000000e+00> : vector<80x512xf32>
    %3 = tpu.matmul %1, %2, %cst {dimension_numbers = #tpu.dot_dimension_numbers<[1], [0], [0], [1], [0, 0, 1, 1], [], []>} : vector<80x8xbf16>, vector<8x512xbf16>, vector<80x512xf32> -> vector<80x512xf32>
    %c0_4 = arith.constant 0 : index
    %c0_5 = arith.constant 0 : index
    %4 = vector.load %arg4[%c0_4, %c0_5] : memref<1x512xf32, #tpu.memory_space<vmem>>, vector<1x512xf32>
    %5 = vector.broadcast %4 : vector<1x512xf32> to vector<80x512xf32>
    %6 = arith.addf %3, %5 : vector<80x512xf32>
    %cst_6 = arith.constant 0.000000e+00 : f32
    %7 = vector.broadcast %cst_6 : f32 to vector<80x512xf32>
    %8 = arith.maximumf %6, %7 : vector<80x512xf32>
    %9 = arith.truncf %8 : vector<80x512xf32> to vector<80x512xbf16>
    %c0_7 = arith.constant 0 : index
    %c0_8 = arith.constant 0 : index
    %10 = vector.load %arg21[%c0_7, %c0_8] : memref<512x128xbf16, #tpu.memory_space<vmem>>, vector<512x128xbf16>
    %cst_9 = arith.constant dense<0.000000e+00> : vector<80x128xf32>
    %11 = tpu.matmul %9, %10, %cst_9 {dimension_numbers = #tpu.dot_dimension_numbers<[1], [0], [0], [1], [0, 0, 1, 1], [], []>} : vector<80x512xbf16>, vector<512x128xbf16>, vector<80x128xf32> -> vector<80x128xf32>
    %c0_10 = arith.constant 0 : index
    %c0_11 = arith.constant 0 : index
    %c0_12 = arith.constant 0 : index
    %12 = vector.load %arg2[%c0_10, %c0_11, %c0_12] : memref<1x5x8xbf16, #tpu.memory_space<vmem>>, vector<1x5x8xbf16>
    %13 = vector.shape_cast %12 : vector<1x5x8xbf16> to vector<5x8xbf16>
    %c0_13 = arith.constant 0 : index
    %c0_14 = arith.constant 0 : index
    %14 = vector.load %arg5[%c0_13, %c0_14] : memref<8x256xbf16, #tpu.memory_space<vmem>>, vector<8x256xbf16>
    %cst_15 = arith.constant dense<0.000000e+00> : vector<5x256xf32>
    %15 = tpu.matmul %13, %14, %cst_15 {dimension_numbers = #tpu.dot_dimension_numbers<[1], [0], [0], [1], [0, 0, 1, 1], [], []>} : vector<5x8xbf16>, vector<8x256xbf16>, vector<5x256xf32> -> vector<5x256xf32>
    %c0_16 = arith.constant 0 : index
    %c0_17 = arith.constant 0 : index
    %16 = vector.load %arg6[%c0_16, %c0_17] : memref<1x256xf32, #tpu.memory_space<vmem>>, vector<1x256xf32>
    %17 = vector.broadcast %16 : vector<1x256xf32> to vector<5x256xf32>
    %18 = arith.addf %15, %17 : vector<5x256xf32>
    %cst_18 = arith.constant 0.000000e+00 : f32
    %19 = vector.broadcast %cst_18 : f32 to vector<5x256xf32>
    %20 = arith.maximumf %18, %19 : vector<5x256xf32>
    %21 = arith.truncf %20 : vector<5x256xf32> to vector<5x256xbf16>
    %c0_19 = arith.constant 0 : index
    %c0_20 = arith.constant 0 : index
    %22 = vector.load %arg7[%c0_19, %c0_20] : memref<256x256xbf16, #tpu.memory_space<vmem>>, vector<256x256xbf16>
    %cst_21 = arith.constant dense<0.000000e+00> : vector<5x256xf32>
    %23 = tpu.matmul %21, %22, %cst_21 {dimension_numbers = #tpu.dot_dimension_numbers<[1], [0], [0], [1], [0, 0, 1, 1], [], []>} : vector<5x256xbf16>, vector<256x256xbf16>, vector<5x256xf32> -> vector<5x256xf32>
    %c0_22 = arith.constant 0 : index
    %c0_23 = arith.constant 0 : index
    %24 = vector.load %arg8[%c0_22, %c0_23] : memref<1x256xf32, #tpu.memory_space<vmem>>, vector<1x256xf32>
    %25 = vector.broadcast %24 : vector<1x256xf32> to vector<5x256xf32>
    %26 = arith.addf %23, %25 : vector<5x256xf32>
    %cst_24 = arith.constant 0.000000e+00 : f32
    %27 = vector.broadcast %cst_24 : f32 to vector<5x256xf32>
    %28 = arith.maximumf %26, %27 : vector<5x256xf32>
    %29 = arith.truncf %28 : vector<5x256xf32> to vector<5x256xbf16>
    %c0_25 = arith.constant 0 : index
    %c0_26 = arith.constant 0 : index
    %30 = vector.load %arg9[%c0_25, %c0_26] : memref<256x128xbf16, #tpu.memory_space<vmem>>, vector<256x128xbf16>
    %cst_27 = arith.constant dense<0.000000e+00> : vector<5x128xf32>
    %31 = tpu.matmul %29, %30, %cst_27 {dimension_numbers = #tpu.dot_dimension_numbers<[1], [0], [0], [1], [0, 0, 1, 1], [], []>} : vector<5x256xbf16>, vector<256x128xbf16>, vector<5x128xf32> -> vector<5x128xf32>
    %c0_28 = arith.constant 0 : index
    %c0_29 = arith.constant 0 : index
    %32 = vector.load %arg10[%c0_28, %c0_29] : memref<1x128xf32, #tpu.memory_space<vmem>>, vector<1x128xf32>
    %33 = vector.broadcast %32 : vector<1x128xf32> to vector<5x128xf32>
    %34 = arith.addf %31, %33 : vector<5x128xf32>
    %cst_30 = arith.constant 0.000000e+00 : f32
    %35 = vector.broadcast %cst_30 : f32 to vector<5x128xf32>
    %36 = arith.maximumf %34, %35 : vector<5x128xf32>
    %37 = arith.truncf %36 : vector<5x128xf32> to vector<5x128xbf16>
    %c0_31 = arith.constant 0 : index
    %c0_32 = arith.constant 0 : index
    %38 = vector.load %arg11[%c0_31, %c0_32] : memref<128x128xbf16, #tpu.memory_space<vmem>>, vector<128x128xbf16>
    %cst_33 = arith.constant dense<0.000000e+00> : vector<5x128xf32>
    %39 = tpu.matmul %37, %38, %cst_33 {dimension_numbers = #tpu.dot_dimension_numbers<[1], [0], [0], [1], [0, 0, 1, 1], [], []>} : vector<5x128xbf16>, vector<128x128xbf16>, vector<5x128xf32> -> vector<5x128xf32>
    %c0_34 = arith.constant 0 : index
    %c0_35 = arith.constant 0 : index
    %40 = vector.load %arg12[%c0_34, %c0_35] : memref<1x128xf32, #tpu.memory_space<vmem>>, vector<1x128xf32>
    %41 = vector.broadcast %40 : vector<1x128xf32> to vector<5x128xf32>
    %42 = arith.addf %39, %41 : vector<5x128xf32>
    %43 = arith.truncf %20 : vector<5x256xf32> to vector<5x256xbf16>
    %c0_36 = arith.constant 0 : index
    %c0_37 = arith.constant 0 : index
    %44 = vector.load %arg13[%c0_36, %c0_37] : memref<256x256xbf16, #tpu.memory_space<vmem>>, vector<256x256xbf16>
    %cst_38 = arith.constant dense<0.000000e+00> : vector<5x256xf32>
    %45 = tpu.matmul %43, %44, %cst_38 {dimension_numbers = #tpu.dot_dimension_numbers<[1], [0], [0], [1], [0, 0, 1, 1], [], []>} : vector<5x256xbf16>, vector<256x256xbf16>, vector<5x256xf32> -> vector<5x256xf32>
    %c0_39 = arith.constant 0 : index
    %c0_40 = arith.constant 0 : index
    %46 = vector.load %arg14[%c0_39, %c0_40] : memref<1x256xf32, #tpu.memory_space<vmem>>, vector<1x256xf32>
    %47 = vector.broadcast %46 : vector<1x256xf32> to vector<5x256xf32>
    %48 = arith.addf %45, %47 : vector<5x256xf32>
    %cst_41 = arith.constant 0.000000e+00 : f32
    %49 = vector.broadcast %cst_41 : f32 to vector<5x256xf32>
    %50 = arith.maximumf %48, %49 : vector<5x256xf32>
    %51 = arith.truncf %50 : vector<5x256xf32> to vector<5x256xbf16>
    %c0_42 = arith.constant 0 : index
    %c0_43 = arith.constant 0 : index
    %52 = vector.load %arg15[%c0_42, %c0_43] : memref<256x128xbf16, #tpu.memory_space<vmem>>, vector<256x128xbf16>
    %cst_44 = arith.constant dense<0.000000e+00> : vector<5x128xf32>
    %53 = tpu.matmul %51, %52, %cst_44 {dimension_numbers = #tpu.dot_dimension_numbers<[1], [0], [0], [1], [0, 0, 1, 1], [], []>} : vector<5x256xbf16>, vector<256x128xbf16>, vector<5x128xf32> -> vector<5x128xf32>
    %c0_45 = arith.constant 0 : index
    %c0_46 = arith.constant 0 : index
    %54 = vector.load %arg16[%c0_45, %c0_46] : memref<1x128xf32, #tpu.memory_space<vmem>>, vector<1x128xf32>
    %55 = vector.broadcast %54 : vector<1x128xf32> to vector<5x128xf32>
    %56 = arith.addf %53, %55 : vector<5x128xf32>
    %cst_47 = arith.constant 0.000000e+00 : f32
    %57 = vector.broadcast %cst_47 : f32 to vector<5x128xf32>
    %58 = arith.maximumf %56, %57 : vector<5x128xf32>
    %59 = arith.truncf %58 : vector<5x128xf32> to vector<5x128xbf16>
    %c0_48 = arith.constant 0 : index
    %c0_49 = arith.constant 0 : index
    %60 = vector.load %arg17[%c0_48, %c0_49] : memref<128x128xbf16, #tpu.memory_space<vmem>>, vector<128x128xbf16>
    %cst_50 = arith.constant dense<0.000000e+00> : vector<5x128xf32>
    %61 = tpu.matmul %59, %60, %cst_50 {dimension_numbers = #tpu.dot_dimension_numbers<[1], [0], [0], [1], [0, 0, 1, 1], [], []>} : vector<5x128xbf16>, vector<128x128xbf16>, vector<5x128xf32> -> vector<5x128xf32>
    %c0_51 = arith.constant 0 : index
    %c0_52 = arith.constant 0 : index
    %62 = vector.load %arg18[%c0_51, %c0_52] : memref<1x128xf32, #tpu.memory_space<vmem>>, vector<1x128xf32>
    %63 = vector.broadcast %62 : vector<1x128xf32> to vector<5x128xf32>
    %64 = arith.addf %61, %63 : vector<5x128xf32>
    %65 = arith.truncf %64 : vector<5x128xf32> to vector<5x128xbf16>
    %c0_53 = arith.constant 0 : index
    %c0_54 = arith.constant 0 : index
    %66 = vector.load %arg19[%c0_53, %c0_54] : memref<128x128xbf16, #tpu.memory_space<vmem>>, vector<128x128xbf16>
    %cst_55 = arith.constant dense<0.000000e+00> : vector<5x128xf32>
    %67 = tpu.matmul %65, %66, %cst_55 {dimension_numbers = #tpu.dot_dimension_numbers<[1], [0], [0], [1], [0, 0, 1, 1], [], []>} : vector<5x128xbf16>, vector<128x128xbf16>, vector<5x128xf32> -> vector<5x128xf32>
    %c0_56 = arith.constant 0 : index
    %c0_57 = arith.constant 0 : index
    %68 = vector.load %arg20[%c0_56, %c0_57] : memref<1x128xf32, #tpu.memory_space<vmem>>, vector<1x128xf32>
    %69 = vector.broadcast %68 : vector<1x128xf32> to vector<5x128xf32>
    %70 = arith.addf %67, %69 : vector<5x128xf32>
    %71 = arith.truncf %70 : vector<5x128xf32> to vector<5x128xbf16>
    %72 = arith.truncf %42 : vector<5x128xf32> to vector<5x128xbf16>
    %cst_58 = arith.constant dense<0.000000e+00> : vector<5x5xf32>
    %73 = tpu.matmul %71, %72, %cst_58 {dimension_numbers = #tpu.dot_dimension_numbers<[1], [1], [0], [0], [0, 0, 1, 0], [], []>} : vector<5x128xbf16>, vector<5x128xbf16>, vector<5x5xf32> -> vector<5x5xf32>
    %cst_59 = arith.constant dense<0xFF800000> : vector<5xf32>
    %74 = vector.multi_reduction <maximumf>, %73, %cst_59 [1] : vector<5x5xf32> to vector<5xf32>
    %75 = vector.shape_cast %74 : vector<5xf32> to vector<5x1xf32>
    %76 = vector.broadcast %75 : vector<5x1xf32> to vector<5x5xf32>
    %77 = arith.subf %73, %76 : vector<5x5xf32>
    %78 = math.exp %77 : vector<5x5xf32>
    %cst_60 = arith.constant dense<0.000000e+00> : vector<5xf32>
    %79 = vector.multi_reduction <add>, %78, %cst_60 [1] : vector<5x5xf32> to vector<5xf32>
    %80 = vector.shape_cast %79 : vector<5xf32> to vector<5x1xf32>
    %81 = tpu.reciprocal %80 {approx = true} : vector<5x1xf32> -> vector<5x1xf32>
    %82 = vector.broadcast %81 : vector<5x1xf32> to vector<5x5xf32>
    %83 = arith.mulf %78, %82 : vector<5x5xf32>
    %c0_61 = arith.constant 0 : index
    %c0_62 = arith.constant 0 : index
    %c0_63 = arith.constant 0 : index
    %84 = vector.load %arg23[%c0_61, %c0_62, %c0_63] : memref<1x5x5xf32, #tpu.memory_space<vmem>>, vector<1x5x5xf32>
    %85 = vector.shape_cast %84 : vector<1x5x5xf32> to vector<5x5xf32>
    %86 = vector.shape_cast %83 : vector<5x5xf32> to vector<1x5x5xf32>
    tpu.vector_store %arg23[%c0_61, %c0_62, %c0_63], %86 {strides = array<i32>} : memref<1x5x5xf32, #tpu.memory_space<vmem>>, vector<1x5x5xf32>,
    %cst_64 = arith.constant 0.000000e+00 : f32
    %87 = vector.broadcast %cst_64 : f32 to vector<5x16x128xf32>
    %88 = vector.extract_strided_slice %11 {offsets = [0, 0], sizes = [16, 128], strides = [1, 1]} : vector<80x128xf32> to vector<16x128xf32>
    %89 = vector.extract_strided_slice %83 {offsets = [0, 0], sizes = [5, 1], strides = [1, 1]} : vector<5x5xf32> to vector<5x1xf32>
    %90 = vector.shape_cast %89 : vector<5x1xf32> to vector<5xf32>
    %91 = vector.shape_cast %90 : vector<5xf32> to vector<5x1x1xf32>
    %92 = vector.shape_cast %88 : vector<16x128xf32> to vector<1x16x128xf32>
    %93 = vector.broadcast %91 : vector<5x1x1xf32> to vector<5x16x128xf32>
    %94 = vector.broadcast %92 : vector<1x16x128xf32> to vector<5x16x128xf32>
    %95 = arith.mulf %93, %94 : vector<5x16x128xf32>
    %96 = arith.addf %87, %95 : vector<5x16x128xf32>
    %97 = vector.extract_strided_slice %11 {offsets = [16, 0], sizes = [16, 128], strides = [1, 1]} : vector<80x128xf32> to vector<16x128xf32>
    %98 = vector.extract_strided_slice %83 {offsets = [0, 1], sizes = [5, 1], strides = [1, 1]} : vector<5x5xf32> to vector<5x1xf32>
    %99 = vector.shape_cast %98 : vector<5x1xf32> to vector<5xf32>
    %100 = vector.shape_cast %99 : vector<5xf32> to vector<5x1x1xf32>
    %101 = vector.shape_cast %97 : vector<16x128xf32> to vector<1x16x128xf32>
    %102 = vector.broadcast %100 : vector<5x1x1xf32> to vector<5x16x128xf32>
    %103 = vector.broadcast %101 : vector<1x16x128xf32> to vector<5x16x128xf32>
    %104 = arith.mulf %102, %103 : vector<5x16x128xf32>
    %105 = arith.addf %96, %104 : vector<5x16x128xf32>
    %106 = vector.extract_strided_slice %11 {offsets = [32, 0], sizes = [16, 128], strides = [1, 1]} : vector<80x128xf32> to vector<16x128xf32>
    %107 = vector.extract_strided_slice %83 {offsets = [0, 2], sizes = [5, 1], strides = [1, 1]} : vector<5x5xf32> to vector<5x1xf32>
    %108 = vector.shape_cast %107 : vector<5x1xf32> to vector<5xf32>
    %109 = vector.shape_cast %108 : vector<5xf32> to vector<5x1x1xf32>
    %110 = vector.shape_cast %106 : vector<16x128xf32> to vector<1x16x128xf32>
    %111 = vector.broadcast %109 : vector<5x1x1xf32> to vector<5x16x128xf32>
    %112 = vector.broadcast %110 : vector<1x16x128xf32> to vector<5x16x128xf32>
    %113 = arith.mulf %111, %112 : vector<5x16x128xf32>
    %114 = arith.addf %105, %113 : vector<5x16x128xf32>
    %115 = vector.extract_strided_slice %11 {offsets = [48, 0], sizes = [16, 128], strides = [1, 1]} : vector<80x128xf32> to vector<16x128xf32>
    %116 = vector.extract_strided_slice %83 {offsets = [0, 3], sizes = [5, 1], strides = [1, 1]} : vector<5x5xf32> to vector<5x1xf32>
    %117 = vector.shape_cast %116 : vector<5x1xf32> to vector<5xf32>
    %118 = vector.shape_cast %117 : vector<5xf32> to vector<5x1x1xf32>
    %119 = vector.shape_cast %115 : vector<16x128xf32> to vector<1x16x128xf32>
    %120 = vector.broadcast %118 : vector<5x1x1xf32> to vector<5x16x128xf32>
    %121 = vector.broadcast %119 : vector<1x16x128xf32> to vector<5x16x128xf32>
    %122 = arith.mulf %120, %121 : vector<5x16x128xf32>
    %123 = arith.addf %114, %122 : vector<5x16x128xf32>
    %124 = vector.extract_strided_slice %11 {offsets = [64, 0], sizes = [16, 128], strides = [1, 1]} : vector<80x128xf32> to vector<16x128xf32>
    %125 = vector.extract_strided_slice %83 {offsets = [0, 4], sizes = [5, 1], strides = [1, 1]} : vector<5x5xf32> to vector<5x1xf32>
    %126 = vector.shape_cast %125 : vector<5x1xf32> to vector<5xf32>
    %127 = vector.shape_cast %126 : vector<5xf32> to vector<5x1x1xf32>
    %128 = vector.shape_cast %124 : vector<16x128xf32> to vector<1x16x128xf32>
    %129 = vector.broadcast %127 : vector<5x1x1xf32> to vector<5x16x128xf32>
    %130 = vector.broadcast %128 : vector<1x16x128xf32> to vector<5x16x128xf32>
    %131 = arith.mulf %129, %130 : vector<5x16x128xf32>
    %132 = arith.addf %123, %131 : vector<5x16x128xf32>
    %c0_65 = arith.constant 0 : index
    %c0_66 = arith.constant 0 : index
    %133 = vector.load %arg22[%c0_65, %c0_66] : memref<1x128xf32, #tpu.memory_space<vmem>>, vector<1x128xf32>
    %134 = vector.shape_cast %133 : vector<1x128xf32> to vector<1x1x128xf32>
    %135 = vector.broadcast %134 : vector<1x1x128xf32> to vector<5x16x128xf32>
    %136 = arith.addf %132, %135 : vector<5x16x128xf32>
    %c0_67 = arith.constant 0 : index
    %c0_68 = arith.constant 0 : index
    %c0_69 = arith.constant 0 : index
    %c0_70 = arith.constant 0 : index
    %137 = vector.load %arg24[%c0_67, %c0_68, %c0_69, %c0_70] : memref<1x5x16x128xf32, #tpu.memory_space<vmem>>, vector<1x5x16x128xf32>
    %138 = vector.shape_cast %137 : vector<1x5x16x128xf32> to vector<5x16x128xf32>
    %139 = vector.shape_cast %136 : vector<5x16x128xf32> to vector<1x5x16x128xf32>
    tpu.vector_store %arg24[%c0_67, %c0_68, %c0_69, %c0_70], %139 {strides = array<i32>} : memref<1x5x16x128xf32, #tpu.memory_space<vmem>>, vector<1x5x16x128xf32>,
    return
  }
  func.func @transform_0(%arg0: i32) -> (i32, i32, i32) {
    %c0_i32 = arith.constant 0 : i32
    %c0_i32_0 = arith.constant 0 : i32
    %c0_i32_1 = arith.constant 0 : i32
    return %arg0, %c0_i32, %c0_i32_0 : i32, i32, i32
  }
  func.func @transform_1(%arg0: i32) -> (i32, i32, i32) {
    %c0_i32 = arith.constant 0 : i32
    %c0_i32_0 = arith.constant 0 : i32
    %c0_i32_1 = arith.constant 0 : i32
    return %arg0, %c0_i32, %c0_i32_0 : i32, i32, i32
  }
  func.func @transform_2(%arg0: i32) -> (i32, i32) {
    %c0_i32 = arith.constant 0 : i32
    %c0_i32_0 = arith.constant 0 : i32
    %c0_i32_1 = arith.constant 0 : i32
    return %c0_i32, %c0_i32_0 : i32, i32
  }
  func.func @transform_3(%arg0: i32) -> (i32, i32) {
    %c0_i32 = arith.constant 0 : i32
    %c0_i32_0 = arith.constant 0 : i32
    %c0_i32_1 = arith.constant 0 : i32
    return %c0_i32, %c0_i32_0 : i32, i32
  }
  func.func @transform_4(%arg0: i32) -> (i32, i32) {
    %c0_i32 = arith.constant 0 : i32
    %c0_i32_0 = arith.constant 0 : i32
    %c0_i32_1 = arith.constant 0 : i32
    return %c0_i32, %c0_i32_0 : i32, i32
  }
  func.func @transform_5(%arg0: i32) -> (i32, i32) {
    %c0_i32 = arith.constant 0 : i32
    %c0_i32_0 = arith.constant 0 : i32
    %c0_i32_1 = arith.constant 0 : i32
    return %c0_i32, %c0_i32_0 : i32, i32
  }
  func.func @transform_6(%arg0: i32) -> (i32, i32) {
    %c0_i32 = arith.constant 0 : i32
    %c0_i32_0 = arith.constant 0 : i32
    %c0_i32_1 = arith.constant 0 : i32
    return %c0_i32, %c0_i32_0 : i32, i32
  }
  func.func @transform_7(%arg0: i32) -> (i32, i32) {
    %c0_i32 = arith.constant 0 : i32
    %c0_i32_0 = arith.constant 0 : i32
    %c0_i32_1 = arith.constant 0 : i32
    return %c0_i32, %c0_i32_0 : i32, i32
  }
  func.func @transform_8(%arg0: i32) -> (i32, i32) {
    %c0_i32 = arith.constant 0 : i32
    %c0_i32_0 = arith.constant 0 : i32
    %c0_i32_1 = arith.constant 0 : i32
    return %c0_i32, %c0_i32_0 : i32, i32
  }
  func.func @transform_9(%arg0: i32) -> (i32, i32) {
    %c0_i32 = arith.constant 0 : i32
    %c0_i32_0 = arith.constant 0 : i32
    %c0_i32_1 = arith.constant 0 : i32
    return %c0_i32, %c0_i32_0 : i32, i32
  }
  func.func @transform_10(%arg0: i32) -> (i32, i32) {
    %c0_i32 = arith.constant 0 : i32
    %c0_i32_0 = arith.constant 0 : i32
    %c0_i32_1 = arith.constant 0 : i32
    return %c0_i32, %c0_i32_0 : i32, i32
  }
  func.func @transform_11(%arg0: i32) -> (i32, i32) {
    %c0_i32 = arith.constant 0 : i32
    %c0_i32_0 = arith.constant 0 : i32
    %c0_i32_1 = arith.constant 0 : i32
    return %c0_i32, %c0_i32_0 : i32, i32
  }
  func.func @transform_12(%arg0: i32) -> (i32, i32) {
    %c0_i32 = arith.constant 0 : i32
    %c0_i32_0 = arith.constant 0 : i32
    %c0_i32_1 = arith.constant 0 : i32
    return %c0_i32, %c0_i32_0 : i32, i32
  }
  func.func @transform_13(%arg0: i32) -> (i32, i32) {
    %c0_i32 = arith.constant 0 : i32
    %c0_i32_0 = arith.constant 0 : i32
    %c0_i32_1 = arith.constant 0 : i32
    return %c0_i32, %c0_i32_0 : i32, i32
  }
  func.func @transform_14(%arg0: i32) -> (i32, i32) {
    %c0_i32 = arith.constant 0 : i32
    %c0_i32_0 = arith.constant 0 : i32
    %c0_i32_1 = arith.constant 0 : i32
    return %c0_i32, %c0_i32_0 : i32, i32
  }
  func.func @transform_15(%arg0: i32) -> (i32, i32) {
    %c0_i32 = arith.constant 0 : i32
    %c0_i32_0 = arith.constant 0 : i32
    %c0_i32_1 = arith.constant 0 : i32
    return %c0_i32, %c0_i32_0 : i32, i32
  }
  func.func @transform_16(%arg0: i32) -> (i32, i32) {
    %c0_i32 = arith.constant 0 : i32
    %c0_i32_0 = arith.constant 0 : i32
    %c0_i32_1 = arith.constant 0 : i32
    return %c0_i32, %c0_i32_0 : i32, i32
  }
  func.func @transform_17(%arg0: i32) -> (i32, i32) {
    %c0_i32 = arith.constant 0 : i32
    %c0_i32_0 = arith.constant 0 : i32
    %c0_i32_1 = arith.constant 0 : i32
    return %c0_i32, %c0_i32_0 : i32, i32
  }
  func.func @transform_18(%arg0: i32) -> (i32, i32) {
    %c0_i32 = arith.constant 0 : i32
    %c0_i32_0 = arith.constant 0 : i32
    %c0_i32_1 = arith.constant 0 : i32
    return %c0_i32, %c0_i32_0 : i32, i32
  }
  func.func @transform_19(%arg0: i32) -> (i32, i32) {
    %c0_i32 = arith.constant 0 : i32
    %c0_i32_0 = arith.constant 0 : i32
    %c0_i32_1 = arith.constant 0 : i32
    return %c0_i32, %c0_i32_0 : i32, i32
  }
  func.func @transform_20(%arg0: i32) -> (i32, i32) {
    %c0_i32 = arith.constant 0 : i32
    %c0_i32_0 = arith.constant 0 : i32
    %c0_i32_1 = arith.constant 0 : i32
    return %c0_i32, %c0_i32_0 : i32, i32
  }
  func.func @transform_21(%arg0: i32) -> (i32, i32) {
    %c0_i32 = arith.constant 0 : i32
    %c0_i32_0 = arith.constant 0 : i32
    %c0_i32_1 = arith.constant 0 : i32
    return %c0_i32, %c0_i32_0 : i32, i32
  }
  func.func @transform_22(%arg0: i32) -> (i32, i32, i32) {
    %c0_i32 = arith.constant 0 : i32
    %c0_i32_0 = arith.constant 0 : i32
    %c0_i32_1 = arith.constant 0 : i32
    return %arg0, %c0_i32, %c0_i32_0 : i32, i32, i32
  }
  func.func @transform_23(%arg0: i32) -> (i32, i32, i32, i32) {
    %c0_i32 = arith.constant 0 : i32
    %c0_i32_0 = arith.constant 0 : i32
    %c0_i32_1 = arith.constant 0 : i32
    %c0_i32_2 = arith.constant 0 : i32
    return %arg0, %c0_i32, %c0_i32_0, %c0_i32_1 : i32, i32, i32, i32
  }
}

</mosaic_0001>

<llo_original>
// kernel: mimocom_forward.1
$region0: #{mimocom_forward.1}
  #allocation0 [shape = 'u32[]', space=smem, size = 0x4, offset = 0x4, fixed_abs, tag = 'smem constant byte address 0x4 - core index']
  #allocation1 [shape = 'u32[72,128]{1,0:T(1,128)}', space=vmem, size = 0x9000, scoped, tag = 'internal scratch']
  %s0 = inlined_call_operand.vmem [shape: bf16[2,80,8], index: 0, kind: input, shape index: {}]
  %s1 = inlined_call_operand.vmem [shape: bf16[2,5,8], index: 1, kind: input, shape index: {}]
  %s2 = inlined_call_operand.vmem [shape: bf16[8,512], index: 2, kind: input, shape index: {}]
  %s3 = inlined_call_operand.vmem [shape: f32[1,512], index: 3, kind: input, shape index: {}]
  %s4 = inlined_call_operand.vmem [shape: bf16[8,256], index: 4, kind: input, shape index: {}]
  %s5 = inlined_call_operand.vmem [shape: f32[1,256], index: 5, kind: input, shape index: {}]
  %s6 = inlined_call_operand.vmem [shape: bf16[256,256], index: 6, kind: input, shape index: {}]
  %s7 = inlined_call_operand.vmem [shape: f32[1,256], index: 7, kind: input, shape index: {}]
  %s8 = inlined_call_operand.vmem [shape: bf16[256,128], index: 8, kind: input, shape index: {}]
  %s9 = inlined_call_operand.vmem [shape: f32[1,128], index: 9, kind: input, shape index: {}]
  %s10 = inlined_call_operand.vmem [shape: bf16[128,128], index: 10, kind: input, shape index: {}]
  %s11 = inlined_call_operand.vmem [shape: f32[1,128], index: 11, kind: input, shape index: {}]
  %s12 = inlined_call_operand.vmem [shape: bf16[256,256], index: 12, kind: input, shape index: {}]
  %s13 = inlined_call_operand.vmem [shape: f32[1,256], index: 13, kind: input, shape index: {}]
  %s14 = inlined_call_operand.vmem [shape: bf16[256,128], index: 14, kind: input, shape index: {}]
  %s15 = inlined_call_operand.vmem [shape: f32[1,128], index: 15, kind: input, shape index: {}]
  %s16 = inlined_call_operand.vmem [shape: bf16[128,128], index: 16, kind: input, shape index: {}]
  %s17 = inlined_call_operand.vmem [shape: f32[1,128], index: 17, kind: input, shape index: {}]
  %s18 = inlined_call_operand.vmem [shape: bf16[128,128], index: 18, kind: input, shape index: {}]
  %s19 = inlined_call_operand.vmem [shape: f32[1,128], index: 19, kind: input, shape index: {}]
  %s20 = inlined_call_operand.vmem [shape: bf16[512,128], index: 20, kind: input, shape index: {}]
  %s21 = inlined_call_operand.vmem [shape: f32[1,128], index: 21, kind: input, shape index: {}]
  %s22 = inlined_call_operand.vmem [shape: f32[2,5,5], index: 22, kind: output, shape index: {0}]
  %s23 = inlined_call_operand.vmem [shape: f32[2,5,16,128], index: 23, kind: output, shape index: {1}]
  %24 = xla_tuple %s22, %s23
  %s25 = sld [smem:[#allocation0]]
  $region129: #{mimocom_forward.1} parent=0
    _
  %s27 = ssub.s32 1, %s25
  %s28 = scalar_select 0, %s27, %s25
  loop: start=0, step=1, limit=4
  $region2: #{mimocom_forward.1} parent=0 // loop_pre_header
    _
  $region3: #{mimocom_forward.1} parent=0 // loop_header
    %s30 = sphi 0, %s34
    %p31 = scmp.ge.s32.totalorder %s30, 4
    %s40 = sphi 0, %s42
    %s43 = sphi 0, %s40
    %s44 = sphi 0, %s43
    %s60 = sphi 0, %s44
    %s66 = sphi 0, %s68
    %s69 = sphi 0, %s66
    %s70 = sphi 0, %s69
    %s86 = sphi 0, %s70
    %s90 = sphi 0, %s90
    %s92 = sphi 0, %s90
    %s93 = sphi 0, %s92
    %s107 = sphi 0, %s93
    %s111 = sphi 0, %s111
    %s113 = sphi 0, %s111
    %s114 = sphi 0, %s113
    %s128 = sphi 0, %s114
    %s132 = sphi 0, %s132
    %s134 = sphi 0, %s132
    %s135 = sphi 0, %s134
    %s149 = sphi 0, %s135
    %s153 = sphi 0, %s153
    %s155 = sphi 0, %s153
    %s156 = sphi 0, %s155
    %s170 = sphi 0, %s156
    %s174 = sphi 0, %s174
    %s176 = sphi 0, %s174
    %s177 = sphi 0, %s176
    %s191 = sphi 0, %s177
    %s195 = sphi 0, %s195
    %s197 = sphi 0, %s195
    %s198 = sphi 0, %s197
    %s212 = sphi 0, %s198
    %s216 = sphi 0, %s216
    %s218 = sphi 0, %s216
    %s219 = sphi 0, %s218
    %s233 = sphi 0, %s219
    %s237 = sphi 0, %s237
    %s239 = sphi 0, %s237
    %s240 = sphi 0, %s239
    %s254 = sphi 0, %s240
    %s258 = sphi 0, %s258
    %s260 = sphi 0, %s258
    %s261 = sphi 0, %s260
    %s275 = sphi 0, %s261
    %s279 = sphi 0, %s279
    %s281 = sphi 0, %s279
    %s282 = sphi 0, %s281
    %s296 = sphi 0, %s282
    %s300 = sphi 0, %s300
    %s302 = sphi 0, %s300
    %s303 = sphi 0, %s302
    %s317 = sphi 0, %s303
    %s321 = sphi 0, %s321
    %s323 = sphi 0, %s321
    %s324 = sphi 0, %s323
    %s338 = sphi 0, %s324
    %s342 = sphi 0, %s342
    %s344 = sphi 0, %s342
    %s345 = sphi 0, %s344
    %s359 = sphi 0, %s345
    %s363 = sphi 0, %s363
    %s365 = sphi 0, %s363
    %s366 = sphi 0, %s365
    %s380 = sphi 0, %s366
    %s384 = sphi 0, %s384
    %s386 = sphi 0, %s384
    %s387 = sphi 0, %s386
    %s401 = sphi 0, %s387
    %s405 = sphi 0, %s405
    %s407 = sphi 0, %s405
    %s408 = sphi 0, %s407
    %s422 = sphi 0, %s408
    %s426 = sphi 0, %s426
    %s428 = sphi 0, %s426
    %s429 = sphi 0, %s428
    %s443 = sphi 0, %s429
    %s447 = sphi 0, %s447
    %s449 = sphi 0, %s447
    %s450 = sphi 0, %s449
    %s464 = sphi 0, %s450
    %s468 = sphi 0, %s468
    %s470 = sphi 0, %s468
    %s471 = sphi 0, %s470
    %s485 = sphi 0, %s471
    %s489 = sphi 0, %s489
    %s491 = sphi 0, %s489
    %s492 = sphi 0, %s491
    %s506 = sphi 0, %s492
    %s512 = sphi 0, %s514
    %s515 = sphi 0, %s512
    %s516 = sphi 0, %s515
    %s532 = sphi 0, %s516
    %s538 = sphi 0, %s540
    %s541 = sphi 0, %s538
    %s542 = sphi 0, %s541
    %s558 = sphi 0, %s542
  $region4: #{mimocom_forward.1} parent=0 // loop_header_branch
    %33 = sbr.rel (%p31) target = $region8
  $region5: #{mimocom_forward.1} parent=0 // loop_body
    %s35 = ssub.s32 %s30, 1
    %s36 = ssub.s32 %s30, 2
    %s37 = sadd.s32 %s30, 1
    %s38 = ssub.s32 %s30, %s37
    %p39 = scmp.eq.s32.totalorder %s38, 0
    %s41 = sadd.s32 %s40, 1
    %s42 = scalar_select %p39, %s40, %s41
    %p45 = pneg %p39
    %p46 = scmp.eq.s32.totalorder %s30, 1
    %p47 = por %p45, %p46
    %p48 = scmp.ne.s32.totalorder %s40, %s43
    %p49 = scmp.eq.s32.totalorder %s30, 0
    %p50 = por %p48, %p49
    %p51 = scmp.ne.s32.totalorder %s40, %s43
    %p52 = scmp.eq.s32.totalorder %s35, 1
    %p53 = por %p51, %p52
    %p54 = scmp.ne.s32.totalorder %s43, %s44
    %p55 = scmp.eq.s32.totalorder %s35, 0
    %p56 = por %p54, %p55
    %p57 = scmp.ne.s32.totalorder %s43, %s44
    %p58 = scmp.eq.s32.totalorder %s36, 1
    %p59 = por %p57, %p58
    %p61 = scmp.ne.s32.totalorder %s44, %s60
    %p62 = scmp.eq.s32.totalorder %s36, 0
    %p63 = por %p61, %p62
    %s64 = ssub.s32 %s30, %s37
    %p65 = scmp.eq.s32.totalorder %s64, 0
    %s67 = sadd.s32 %s66, 1
    %s68 = scalar_select %p65, %s66, %s67
    %p71 = pneg %p65
    %p72 = scmp.eq.s32.totalorder %s30, 1
    %p73 = por %p71, %p72
    %p74 = scmp.ne.s32.totalorder %s66, %s69
    %p75 = scmp.eq.s32.totalorder %s30, 0
    %p76 = por %p74, %p75
    %p77 = scmp.ne.s32.totalorder %s66, %s69
    %p78 = scmp.eq.s32.totalorder %s35, 1
    %p79 = por %p77, %p78
    %p80 = scmp.ne.s32.totalorder %s69, %s70
    %p81 = scmp.eq.s32.totalorder %s35, 0
    %p82 = por %p80, %p81
    %p83 = scmp.ne.s32.totalorder %s69, %s70
    %p84 = scmp.eq.s32.totalorder %s36, 1
    %p85 = por %p83, %p84
    %p87 = scmp.ne.s32.totalorder %s70, %s86
    %p88 = scmp.eq.s32.totalorder %s36, 0
    %p89 = por %p87, %p88
    %s91 = sadd.s32 %s90, 1
    %p94 = scmp.eq.s32.totalorder %s30, 1
    %p95 = scmp.ne.s32.totalorder %s90, %s92
    %p96 = scmp.eq.s32.totalorder %s30, 0
    %p97 = por %p95, %p96
    %p98 = scmp.ne.s32.totalorder %s90, %s92
    %p99 = scmp.eq.s32.totalorder %s35, 1
    %p100 = por %p98, %p99
    %p101 = scmp.ne.s32.totalorder %s92, %s93
    %p102 = scmp.eq.s32.totalorder %s35, 0
    %p103 = por %p101, %p102
    %p104 = scmp.ne.s32.totalorder %s92, %s93
    %p105 = scmp.eq.s32.totalorder %s36, 1
    %p106 = por %p104, %p105
    %p108 = scmp.ne.s32.totalorder %s93, %s107
    %p109 = scmp.eq.s32.totalorder %s36, 0
    %p110 = por %p108, %p109
    %s112 = sadd.s32 %s111, 1
    %p115 = scmp.eq.s32.totalorder %s30, 1
    %p116 = scmp.ne.s32.totalorder %s111, %s113
    %p117 = scmp.eq.s32.totalorder %s30, 0
    %p118 = por %p116, %p117
    %p119 = scmp.ne.s32.totalorder %s111, %s113
    %p120 = scmp.eq.s32.totalorder %s35, 1
    %p121 = por %p119, %p120
    %p122 = scmp.ne.s32.totalorder %s113, %s114
    %p123 = scmp.eq.s32.totalorder %s35, 0
    %p124 = por %p122, %p123
    %p125 = scmp.ne.s32.totalorder %s113, %s114
    %p126 = scmp.eq.s32.totalorder %s36, 1
    %p127 = por %p125, %p126
    %p129 = scmp.ne.s32.totalorder %s114, %s128
    %p130 = scmp.eq.s32.totalorder %s36, 0
    %p131 = por %p129, %p130
    %s133 = sadd.s32 %s132, 1
    %p136 = scmp.eq.s32.totalorder %s30, 1
    %p137 = scmp.ne.s32.totalorder %s132, %s134
    %p138 = scmp.eq.s32.totalorder %s30, 0
    %p139 = por %p137, %p138
    %p140 = scmp.ne.s32.totalorder %s132, %s134
    %p141 = scmp.eq.s32.totalorder %s35, 1
    %p142 = por %p140, %p141
    %p143 = scmp.ne.s32.totalorder %s134, %s135
    %p144 = scmp.eq.s32.totalorder %s35, 0
    %p145 = por %p143, %p144
    %p146 = scmp.ne.s32.totalorder %s134, %s135
    %p147 = scmp.eq.s32.totalorder %s36, 1
    %p148 = por %p146, %p147
    %p150 = scmp.ne.s32.totalorder %s135, %s149
    %p151 = scmp.eq.s32.totalorder %s36, 0
    %p152 = por %p150, %p151
    %s154 = sadd.s32 %s153, 1
    %p157 = scmp.eq.s32.totalorder %s30, 1
    %p158 = scmp.ne.s32.totalorder %s153, %s155
    %p159 = scmp.eq.s32.totalorder %s30, 0
    %p160 = por %p158, %p159
    %p161 = scmp.ne.s32.totalorder %s153, %s155
    %p162 = scmp.eq.s32.totalorder %s35, 1
    %p163 = por %p161, %p162
    %p164 = scmp.ne.s32.totalorder %s155, %s156
    %p165 = scmp.eq.s32.totalorder %s35, 0
    %p166 = por %p164, %p165
    %p167 = scmp.ne.s32.totalorder %s155, %s156
    %p168 = scmp.eq.s32.totalorder %s36, 1
    %p169 = por %p167, %p168
    %p171 = scmp.ne.s32.totalorder %s156, %s170
    %p172 = scmp.eq.s32.totalorder %s36, 0
    %p173 = por %p171, %p172
    %s175 = sadd.s32 %s174, 1
    %p178 = scmp.eq.s32.totalorder %s30, 1
    %p179 = scmp.ne.s32.totalorder %s174, %s176
    %p180 = scmp.eq.s32.totalorder %s30, 0
    %p181 = por %p179, %p180
    %p182 = scmp.ne.s32.totalorder %s174, %s176
    %p183 = scmp.eq.s32.totalorder %s35, 1
    %p184 = por %p182, %p183
    %p185 = scmp.ne.s32.totalorder %s176, %s177
    %p186 = scmp.eq.s32.totalorder %s35, 0
    %p187 = por %p185, %p186
    %p188 = scmp.ne.s32.totalorder %s176, %s177
    %p189 = scmp.eq.s32.totalorder %s36, 1
    %p190 = por %p188, %p189
    %p192 = scmp.ne.s32.totalorder %s177, %s191
    %p193 = scmp.eq.s32.totalorder %s36, 0
    %p194 = por %p192, %p193
    %s196 = sadd.s32 %s195, 1
    %p199 = scmp.eq.s32.totalorder %s30, 1
    %p200 = scmp.ne.s32.totalorder %s195, %s197
    %p201 = scmp.eq.s32.totalorder %s30, 0
    %p202 = por %p200, %p201
    %p203 = scmp.ne.s32.totalorder %s195, %s197
    %p204 = scmp.eq.s32.totalorder %s35, 1
    %p205 = por %p203, %p204
    %p206 = scmp.ne.s32.totalorder %s197, %s198
    %p207 = scmp.eq.s32.totalorder %s35, 0
    %p208 = por %p206, %p207
    %p209 = scmp.ne.s32.totalorder %s197, %s198
    %p210 = scmp.eq.s32.totalorder %s36, 1
    %p211 = por %p209, %p210
    %p213 = scmp.ne.s32.totalorder %s198, %s212
    %p214 = scmp.eq.s32.totalorder %s36, 0
    %p215 = por %p213, %p214
    %s217 = sadd.s32 %s216, 1
    %p220 = scmp.eq.s32.totalorder %s30, 1
    %p221 = scmp.ne.s32.totalorder %s216, %s218
    %p222 = scmp.eq.s32.totalorder %s30, 0
    %p223 = por %p221, %p222
    %p224 = scmp.ne.s32.totalorder %s216, %s218
    %p225 = scmp.eq.s32.totalorder %s35, 1
    %p226 = por %p224, %p225
    %p227 = scmp.ne.s32.totalorder %s218, %s219
    %p228 = scmp.eq.s32.totalorder %s35, 0
    %p229 = por %p227, %p228
    %p230 = scmp.ne.s32.totalorder %s218, %s219
    %p231 = scmp.eq.s32.totalorder %s36, 1
    %p232 = por %p230, %p231
    %p234 = scmp.ne.s32.totalorder %s219, %s233
    %p235 = scmp.eq.s32.totalorder %s36, 0
    %p236 = por %p234, %p235
    %s238 = sadd.s32 %s237, 1
    %p241 = scmp.eq.s32.totalorder %s30, 1
    %p242 = scmp.ne.s32.totalorder %s237, %s239
    %p243 = scmp.eq.s32.totalorder %s30, 0
    %p244 = por %p242, %p243
    %p245 = scmp.ne.s32.totalorder %s237, %s239
    %p246 = scmp.eq.s32.totalorder %s35, 1
    %p247 = por %p245, %p246
    %p248 = scmp.ne.s32.totalorder %s239, %s240
    %p249 = scmp.eq.s32.totalorder %s35, 0
    %p250 = por %p248, %p249
    %p251 = scmp.ne.s32.totalorder %s239, %s240
    %p252 = scmp.eq.s32.totalorder %s36, 1
    %p253 = por %p251, %p252
    %p255 = scmp.ne.s32.totalorder %s240, %s254
    %p256 = scmp.eq.s32.totalorder %s36, 0
    %p257 = por %p255, %p256
    %s259 = sadd.s32 %s258, 1
    %p262 = scmp.eq.s32.totalorder %s30, 1
    %p263 = scmp.ne.s32.totalorder %s258, %s260
    %p264 = scmp.eq.s32.totalorder %s30, 0
    %p265 = por %p263, %p264
    %p266 = scmp.ne.s32.totalorder %s258, %s260
    %p267 = scmp.eq.s32.totalorder %s35, 1
    %p268 = por %p266, %p267
    %p269 = scmp.ne.s32.totalorder %s260, %s261
    %p270 = scmp.eq.s32.totalorder %s35, 0
    %p271 = por %p269, %p270
    %p272 = scmp.ne.s32.totalorder %s260, %s261
    %p273 = scmp.eq.s32.totalorder %s36, 1
    %p274 = por %p272, %p273
    %p276 = scmp.ne.s32.totalorder %s261, %s275
    %p277 = scmp.eq.s32.totalorder %s36, 0
    %p278 = por %p276, %p277
    %s280 = sadd.s32 %s279, 1
    %p283 = scmp.eq.s32.totalorder %s30, 1
    %p284 = scmp.ne.s32.totalorder %s279, %s281
    %p285 = scmp.eq.s32.totalorder %s30, 0
    %p286 = por %p284, %p285
    %p287 = scmp.ne.s32.totalorder %s279, %s281
    %p288 = scmp.eq.s32.totalorder %s35, 1
    %p289 = por %p287, %p288
    %p290 = scmp.ne.s32.totalorder %s281, %s282
    %p291 = scmp.eq.s32.totalorder %s35, 0
    %p292 = por %p290, %p291
    %p293 = scmp.ne.s32.totalorder %s281, %s282
    %p294 = scmp.eq.s32.totalorder %s36, 1
    %p295 = por %p293, %p294
    %p297 = scmp.ne.s32.totalorder %s282, %s296
    %p298 = scmp.eq.s32.totalorder %s36, 0
    %p299 = por %p297, %p298
    %s301 = sadd.s32 %s300, 1
    %p304 = scmp.eq.s32.totalorder %s30, 1
    %p305 = scmp.ne.s32.totalorder %s300, %s302
    %p306 = scmp.eq.s32.totalorder %s30, 0
    %p307 = por %p305, %p306
    %p308 = scmp.ne.s32.totalorder %s300, %s302
    %p309 = scmp.eq.s32.totalorder %s35, 1
    %p310 = por %p308, %p309
    %p311 = scmp.ne.s32.totalorder %s302, %s303
    %p312 = scmp.eq.s32.totalorder %s35, 0
    %p313 = por %p311, %p312
    %p314 = scmp.ne.s32.totalorder %s302, %s303
    %p315 = scmp.eq.s32.totalorder %s36, 1
    %p316 = por %p314, %p315
    %p318 = scmp.ne.s32.totalorder %s303, %s317
    %p319 = scmp.eq.s32.totalorder %s36, 0
    %p320 = por %p318, %p319
    %s322 = sadd.s32 %s321, 1
    %p325 = scmp.eq.s32.totalorder %s30, 1
    %p326 = scmp.ne.s32.totalorder %s321, %s323
    %p327 = scmp.eq.s32.totalorder %s30, 0
    %p328 = por %p326, %p327
    %p329 = scmp.ne.s32.totalorder %s321, %s323
    %p330 = scmp.eq.s32.totalorder %s35, 1
    %p331 = por %p329, %p330
    %p332 = scmp.ne.s32.totalorder %s323, %s324
    %p333 = scmp.eq.s32.totalorder %s35, 0
    %p334 = por %p332, %p333
    %p335 = scmp.ne.s32.totalorder %s323, %s324
    %p336 = scmp.eq.s32.totalorder %s36, 1
    %p337 = por %p335, %p336
    %p339 = scmp.ne.s32.totalorder %s324, %s338
    %p340 = scmp.eq.s32.totalorder %s36, 0
    %p341 = por %p339, %p340
    %s343 = sadd.s32 %s342, 1
    %p346 = scmp.eq.s32.totalorder %s30, 1
    %p347 = scmp.ne.s32.totalorder %s342, %s344
    %p348 = scmp.eq.s32.totalorder %s30, 0
    %p349 = por %p347, %p348
    %p350 = scmp.ne.s32.totalorder %s342, %s344
    %p351 = scmp.eq.s32.totalorder %s35, 1
    %p352 = por %p350, %p351
    %p353 = scmp.ne.s32.totalorder %s344, %s345
    %p354 = scmp.eq.s32.totalorder %s35, 0
    %p355 = por %p353, %p354
    %p356 = scmp.ne.s32.totalorder %s344, %s345
    %p357 = scmp.eq.s32.totalorder %s36, 1
    %p358 = por %p356, %p357
    %p360 = scmp.ne.s32.totalorder %s345, %s359
    %p361 = scmp.eq.s32.totalorder %s36, 0
    %p362 = por %p360, %p361
    %s364 = sadd.s32 %s363, 1
    %p367 = scmp.eq.s32.totalorder %s30, 1
    %p368 = scmp.ne.s32.totalorder %s363, %s365
    %p369 = scmp.eq.s32.totalorder %s30, 0
    %p370 = por %p368, %p369
    %p371 = scmp.ne.s32.totalorder %s363, %s365
    %p372 = scmp.eq.s32.totalorder %s35, 1
    %p373 = por %p371, %p372
    %p374 = scmp.ne.s32.totalorder %s365, %s366
    %p375 = scmp.eq.s32.totalorder %s35, 0
    %p376 = por %p374, %p375
    %p377 = scmp.ne.s32.totalorder %s365, %s366
    %p378 = scmp.eq.s32.totalorder %s36, 1
    %p379 = por %p377, %p378
    %p381 = scmp.ne.s32.totalorder %s366, %s380
    %p382 = scmp.eq.s32.totalorder %s36, 0
    %p383 = por %p381, %p382
    %s385 = sadd.s32 %s384, 1
    %p388 = scmp.eq.s32.totalorder %s30, 1
    %p389 = scmp.ne.s32.totalorder %s384, %s386
    %p390 = scmp.eq.s32.totalorder %s30, 0
    %p391 = por %p389, %p390
    %p392 = scmp.ne.s32.totalorder %s384, %s386
    %p393 = scmp.eq.s32.totalorder %s35, 1
    %p394 = por %p392, %p393
    %p395 = scmp.ne.s32.totalorder %s386, %s387
    %p396 = scmp.eq.s32.totalorder %s35, 0
    %p397 = por %p395, %p396
    %p398 = scmp.ne.s32.totalorder %s386, %s387
    %p399 = scmp.eq.s32.totalorder %s36, 1
    %p400 = por %p398, %p399
    %p402 = scmp.ne.s32.totalorder %s387, %s401
    %p403 = scmp.eq.s32.totalorder %s36, 0
    %p404 = por %p402, %p403
    %s406 = sadd.s32 %s405, 1
    %p409 = scmp.eq.s32.totalorder %s30, 1
    %p410 = scmp.ne.s32.totalorder %s405, %s407
    %p411 = scmp.eq.s32.totalorder %s30, 0
    %p412 = por %p410, %p411
    %p413 = scmp.ne.s32.totalorder %s405, %s407
    %p414 = scmp.eq.s32.totalorder %s35, 1
    %p415 = por %p413, %p414
    %p416 = scmp.ne.s32.totalorder %s407, %s408
    %p417 = scmp.eq.s32.totalorder %s35, 0
    %p418 = por %p416, %p417
    %p419 = scmp.ne.s32.totalorder %s407, %s408
    %p420 = scmp.eq.s32.totalorder %s36, 1
    %p421 = por %p419, %p420
    %p423 = scmp.ne.s32.totalorder %s408, %s422
    %p424 = scmp.eq.s32.totalorder %s36, 0
    %p425 = por %p423, %p424
    %s427 = sadd.s32 %s426, 1
    %p430 = scmp.eq.s32.totalorder %s30, 1
    %p431 = scmp.ne.s32.totalorder %s426, %s428
    %p432 = scmp.eq.s32.totalorder %s30, 0
    %p433 = por %p431, %p432
    %p434 = scmp.ne.s32.totalorder %s426, %s428
    %p435 = scmp.eq.s32.totalorder %s35, 1
    %p436 = por %p434, %p435
    %p437 = scmp.ne.s32.totalorder %s428, %s429
    %p438 = scmp.eq.s32.totalorder %s35, 0
    %p439 = por %p437, %p438
    %p440 = scmp.ne.s32.totalorder %s428, %s429
    %p441 = scmp.eq.s32.totalorder %s36, 1
    %p442 = por %p440, %p441
    %p444 = scmp.ne.s32.totalorder %s429, %s443
    %p445 = scmp.eq.s32.totalorder %s36, 0
    %p446 = por %p444, %p445
    %s448 = sadd.s32 %s447, 1
    %p451 = scmp.eq.s32.totalorder %s30, 1
    %p452 = scmp.ne.s32.totalorder %s447, %s449
    %p453 = scmp.eq.s32.totalorder %s30, 0
    %p454 = por %p452, %p453
    %p455 = scmp.ne.s32.totalorder %s447, %s449
    %p456 = scmp.eq.s32.totalorder %s35, 1
    %p457 = por %p455, %p456
    %p458 = scmp.ne.s32.totalorder %s449, %s450
    %p459 = scmp.eq.s32.totalorder %s35, 0
    %p460 = por %p458, %p459
    %p461 = scmp.ne.s32.totalorder %s449, %s450
    %p462 = scmp.eq.s32.totalorder %s36, 1
    %p463 = por %p461, %p462
    %p465 = scmp.ne.s32.totalorder %s450, %s464
    %p466 = scmp.eq.s32.totalorder %s36, 0
    %p467 = por %p465, %p466
    %s469 = sadd.s32 %s468, 1
    %p472 = scmp.eq.s32.totalorder %s30, 1
    %p473 = scmp.ne.s32.totalorder %s468, %s470
    %p474 = scmp.eq.s32.totalorder %s30, 0
    %p475 = por %p473, %p474
    %p476 = scmp.ne.s32.totalorder %s468, %s470
    %p477 = scmp.eq.s32.totalorder %s35, 1
    %p478 = por %p476, %p477
    %p479 = scmp.ne.s32.totalorder %s470, %s471
    %p480 = scmp.eq.s32.totalorder %s35, 0
    %p481 = por %p479, %p480
    %p482 = scmp.ne.s32.totalorder %s470, %s471
    %p483 = scmp.eq.s32.totalorder %s36, 1
    %p484 = por %p482, %p483
    %p486 = scmp.ne.s32.totalorder %s471, %s485
    %p487 = scmp.eq.s32.totalorder %s36, 0
    %p488 = por %p486, %p487
    %s490 = sadd.s32 %s489, 1
    %p493 = scmp.eq.s32.totalorder %s30, 1
    %p494 = scmp.ne.s32.totalorder %s489, %s491
    %p495 = scmp.eq.s32.totalorder %s30, 0
    %p496 = por %p494, %p495
    %p497 = scmp.ne.s32.totalorder %s489, %s491
    %p498 = scmp.eq.s32.totalorder %s35, 1
    %p499 = por %p497, %p498
    %p500 = scmp.ne.s32.totalorder %s491, %s492
    %p501 = scmp.eq.s32.totalorder %s35, 0
    %p502 = por %p500, %p501
    %p503 = scmp.ne.s32.totalorder %s491, %s492
    %p504 = scmp.eq.s32.totalorder %s36, 1
    %p505 = por %p503, %p504
    %p507 = scmp.ne.s32.totalorder %s492, %s506
    %p508 = scmp.eq.s32.totalorder %s36, 0
    %p509 = por %p507, %p508
    %s510 = ssub.s32 %s30, %s37
    %p511 = scmp.eq.s32.totalorder %s510, 0
    %s513 = sadd.s32 %s512, 1
    %s514 = scalar_select %p511, %s512, %s513
    %p517 = pneg %p511
    %p518 = scmp.eq.s32.totalorder %s30, 1
    %p519 = por %p517, %p518
    %p520 = scmp.ne.s32.totalorder %s512, %s515
    %p521 = scmp.eq.s32.totalorder %s30, 0
    %p522 = por %p520, %p521
    %p523 = scmp.ne.s32.totalorder %s512, %s515
    %p524 = scmp.eq.s32.totalorder %s35, 1
    %p525 = por %p523, %p524
    %p526 = scmp.ne.s32.totalorder %s515, %s516
    %p527 = scmp.eq.s32.totalorder %s35, 0
    %p528 = por %p526, %p527
    %p529 = scmp.ne.s32.totalorder %s515, %s516
    %p530 = scmp.eq.s32.totalorder %s36, 1
    %p531 = por %p529, %p530
    %p533 = scmp.ne.s32.totalorder %s516, %s532
    %p534 = scmp.eq.s32.totalorder %s36, 0
    %p535 = por %p533, %p534
    %s536 = ssub.s32 %s30, %s37
    %p537 = scmp.eq.s32.totalorder %s536, 0
    %s539 = sadd.s32 %s538, 1
    %s540 = scalar_select %p537, %s538, %s539
    %p543 = pneg %p537
    %p544 = scmp.eq.s32.totalorder %s30, 1
    %p545 = por %p543, %p544
    %p546 = scmp.ne.s32.totalorder %s538, %s541
    %p547 = scmp.eq.s32.totalorder %s30, 0
    %p548 = por %p546, %p547
    %p549 = scmp.ne.s32.totalorder %s538, %s541
    %p550 = scmp.eq.s32.totalorder %s35, 1
    %p551 = por %p549, %p550
    %p552 = scmp.ne.s32.totalorder %s541, %s542
    %p553 = scmp.eq.s32.totalorder %s35, 0
    %p554 = por %p552, %p553
    %p555 = scmp.ne.s32.totalorder %s541, %s542
    %p556 = scmp.eq.s32.totalorder %s36, 1
    %p557 = por %p555, %p556
    %p559 = scmp.ne.s32.totalorder %s542, %s558
    %p560 = scmp.eq.s32.totalorder %s36, 0
    %p561 = por %p559, %p560
    %p562 = scmp.le.s32.totalorder 1, %s30
    %p563 = scmp.lt.s32.totalorder %s30, 3
    %p564 = pnand %p562, %p563
    %p565 = pneg %p564
    // Predicated region
    $region9: #{mimocom_forward.1} parent=5 // pred_check
      _
    $region10: #{mimocom_forward.1} parent=5 // pred_check_branch
      %567 = sbr.rel (%p564) target = $region12
    $region11: #{mimocom_forward.1} parent=5 // pred_region
      %s568 = ssub.s32 %s30, 1
      // Predicated region
      $region13: #{mimocom_forward.1} parent=11 // pred_check
        %p569 = pneg %p103
      $region14: #{mimocom_forward.1} parent=11 // pred_check_branch
        %571 = sbr.rel (%p569) target = $region16
      $region15: #{mimocom_forward.1} parent=11 // pred_region
        _
      $region16: #{mimocom_forward.1} parent=11 // pred_fallthru
        _
      // Predicated region
      $region17: #{mimocom_forward.1} parent=11 // pred_check
        %p572 = pneg %p124
      $region18: #{mimocom_forward.1} parent=11 // pred_check_branch
        %574 = sbr.rel (%p572) target = $region20
      $region19: #{mimocom_forward.1} parent=11 // pred_region
        _
      $region20: #{mimocom_forward.1} parent=11 // pred_fallthru
        _
      // Predicated region
      $region21: #{mimocom_forward.1} parent=11 // pred_check
        %p575 = pneg %p145
      $region22: #{mimocom_forward.1} parent=11 // pred_check_branch
        %577 = sbr.rel (%p575) target = $region24
      $region23: #{mimocom_forward.1} parent=11 // pred_region
        _
      $region24: #{mimocom_forward.1} parent=11 // pred_fallthru
        _
      // Predicated region
      $region25: #{mimocom_forward.1} parent=11 // pred_check
        %p578 = pneg %p166
      $region26: #{mimocom_forward.1} parent=11 // pred_check_branch
        %580 = sbr.rel (%p578) target = $region28
      $region27: #{mimocom_forward.1} parent=11 // pred_region
        _
      $region28: #{mimocom_forward.1} parent=11 // pred_fallthru
        _
      // Predicated region
      $region29: #{mimocom_forward.1} parent=11 // pred_check
        %p581 = pneg %p187
      $region30: #{mimocom_forward.1} parent=11 // pred_check_branch
        %583 = sbr.rel (%p581) target = $region32
      $region31: #{mimocom_forward.1} parent=11 // pred_region
        _
      $region32: #{mimocom_forward.1} parent=11 // pred_fallthru
        _
      // Predicated region
      $region33: #{mimocom_forward.1} parent=11 // pred_check
        %p584 = pneg %p208
      $region34: #{mimocom_forward.1} parent=11 // pred_check_branch
        %586 = sbr.rel (%p584) target = $region36
      $region35: #{mimocom_forward.1} parent=11 // pred_region
        _
      $region36: #{mimocom_forward.1} parent=11 // pred_fallthru
        _
      // Predicated region
      $region37: #{mimocom_forward.1} parent=11 // pred_check
        %p587 = pneg %p229
      $region38: #{mimocom_forward.1} parent=11 // pred_check_branch
        %589 = sbr.rel (%p587) target = $region40
      $region39: #{mimocom_forward.1} parent=11 // pred_region
        _
      $region40: #{mimocom_forward.1} parent=11 // pred_fallthru
        _
      // Predicated region
      $region41: #{mimocom_forward.1} parent=11 // pred_check
        %p590 = pneg %p250
      $region42: #{mimocom_forward.1} parent=11 // pred_check_branch
        %592 = sbr.rel (%p590) target = $region44
      $region43: #{mimocom_forward.1} parent=11 // pred_region
        _
      $region44: #{mimocom_forward.1} parent=11 // pred_fallthru
        _
      // Predicated region
      $region45: #{mimocom_forward.1} parent=11 // pred_check
        %p593 = pneg %p271
      $region46: #{mimocom_forward.1} parent=11 // pred_check_branch
        %595 = sbr.rel (%p593) target = $region48
      $region47: #{mimocom_forward.1} parent=11 // pred_region
        _
      $region48: #{mimocom_forward.1} parent=11 // pred_fallthru
        _
      // Predicated region
      $region49: #{mimocom_forward.1} parent=11 // pred_check
        %p596 = pneg %p292
      $region50: #{mimocom_forward.1} parent=11 // pred_check_branch
        %598 = sbr.rel (%p596) target = $region52
      $region51: #{mimocom_forward.1} parent=11 // pred_region
        _
      $region52: #{mimocom_forward.1} parent=11 // pred_fallthru
        _
      // Predicated region
      $region53: #{mimocom_forward.1} parent=11 // pred_check
        %p599 = pneg %p313
      $region54: #{mimocom_forward.1} parent=11 // pred_check_branch
        %601 = sbr.rel (%p599) target = $region56
      $region55: #{mimocom_forward.1} parent=11 // pred_region
        _
      $region56: #{mimocom_forward.1} parent=11 // pred_fallthru
        _
      // Predicated region
      $region57: #{mimocom_forward.1} parent=11 // pred_check
        %p602 = pneg %p334
      $region58: #{mimocom_forward.1} parent=11 // pred_check_branch
        %604 = sbr.rel (%p602) target = $region60
      $region59: #{mimocom_forward.1} parent=11 // pred_region
        _
      $region60: #{mimocom_forward.1} parent=11 // pred_fallthru
        _
      // Predicated region
      $region61: #{mimocom_forward.1} parent=11 // pred_check
        %p605 = pneg %p355
      $region62: #{mimocom_forward.1} parent=11 // pred_check_branch
        %607 = sbr.rel (%p605) target = $region64
      $region63: #{mimocom_forward.1} parent=11 // pred_region
        _
      $region64: #{mimocom_forward.1} parent=11 // pred_fallthru
        _
      // Predicated region
      $region65: #{mimocom_forward.1} parent=11 // pred_check
        %p608 = pneg %p376
      $region66: #{mimocom_forward.1} parent=11 // pred_check_branch
        %610 = sbr.rel (%p608) target = $region68
      $region67: #{mimocom_forward.1} parent=11 // pred_region
        _
      $region68: #{mimocom_forward.1} parent=11 // pred_fallthru
        _
      // Predicated region
      $region69: #{mimocom_forward.1} parent=11 // pred_check
        %p611 = pneg %p397
      $region70: #{mimocom_forward.1} parent=11 // pred_check_branch
        %613 = sbr.rel (%p611) target = $region72
      $region71: #{mimocom_forward.1} parent=11 // pred_region
        _
      $region72: #{mimocom_forward.1} parent=11 // pred_fallthru
        _
      // Predicated region
      $region73: #{mimocom_forward.1} parent=11 // pred_check
        %p614 = pneg %p418
      $region74: #{mimocom_forward.1} parent=11 // pred_check_branch
        %616 = sbr.rel (%p614) target = $region76
      $region75: #{mimocom_forward.1} parent=11 // pred_region
        _
      $region76: #{mimocom_forward.1} parent=11 // pred_fallthru
        _
      // Predicated region
      $region77: #{mimocom_forward.1} parent=11 // pred_check
        %p617 = pneg %p439
      $region78: #{mimocom_forward.1} parent=11 // pred_check_branch
        %619 = sbr.rel (%p617) target = $region80
      $region79: #{mimocom_forward.1} parent=11 // pred_region
        _
      $region80: #{mimocom_forward.1} parent=11 // pred_fallthru
        _
      // Predicated region
      $region81: #{mimocom_forward.1} parent=11 // pred_check
        %p620 = pneg %p460
      $region82: #{mimocom_forward.1} parent=11 // pred_check_branch
        %622 = sbr.rel (%p620) target = $region84
      $region83: #{mimocom_forward.1} parent=11 // pred_region
        _
      $region84: #{mimocom_forward.1} parent=11 // pred_fallthru
        _
      // Predicated region
      $region85: #{mimocom_forward.1} parent=11 // pred_check
        %p623 = pneg %p481
      $region86: #{mimocom_forward.1} parent=11 // pred_check_branch
        %625 = sbr.rel (%p623) target = $region88
      $region87: #{mimocom_forward.1} parent=11 // pred_region
        _
      $region88: #{mimocom_forward.1} parent=11 // pred_fallthru
        _
      // Predicated region
      $region89: #{mimocom_forward.1} parent=11 // pred_check
        %p626 = pneg %p502
      $region90: #{mimocom_forward.1} parent=11 // pred_check_branch
        %628 = sbr.rel (%p626) target = $region92
      $region91: #{mimocom_forward.1} parent=11 // pred_region
        _
      $region92: #{mimocom_forward.1} parent=11 // pred_fallthru
        _
    $region12: #{mimocom_forward.1} parent=5 // pred_fallthru
      _
    %p629 = scmp.lt.s32.totalorder %s30, 2
    // Predicated region
    $region93: #{mimocom_forward.1} parent=5 // pred_check
      %p630 = pneg %p629
    $region94: #{mimocom_forward.1} parent=5 // pred_check_branch
      %632 = sbr.rel (%p630) target = $region96
    $region95: #{mimocom_forward.1} parent=5 // pred_region
      // Predicated region
      $region97: #{mimocom_forward.1} parent=95 // pred_check
        %p633 = pneg %p50
      $region98: #{mimocom_forward.1} parent=95 // pred_check_branch
        %635 = sbr.rel (%p633) target = $region100
      $region99: #{mimocom_forward.1} parent=95 // pred_region
        %p636 = scmp.lt.s32.totalorder %s30, 1
        %s637 = scalar_select %p636, %s30, 1
        %s638 = smul.addr %s637, 10
        %s639 = smul.addr %s638, 4
        %s640 = scalar_lea.vmem %s0, %s639
      $region100: #{mimocom_forward.1} parent=95 // pred_fallthru
        _
      // Predicated region
      $region101: #{mimocom_forward.1} parent=95 // pred_check
        %p641 = pneg %p76
      $region102: #{mimocom_forward.1} parent=95 // pred_check_branch
        %643 = sbr.rel (%p641) target = $region104
      $region103: #{mimocom_forward.1} parent=95 // pred_region
        %p644 = scmp.lt.s32.totalorder %s30, 1
        %s645 = scalar_select %p644, %s30, 1
        %s646 = smul.addr %s645, 4
        %s647 = scalar_lea.vmem %s1, %s646
      $region104: #{mimocom_forward.1} parent=95 // pred_fallthru
        _
    $region96: #{mimocom_forward.1} parent=5 // pred_fallthru
      _
    %p648 = scmp.le.s32.totalorder 1, %s30
    %p649 = scmp.lt.s32.totalorder %s30, 3
    %p650 = pnand %p648, %p649
    %p651 = pneg %p650
    // Predicated region
    $region105: #{mimocom_forward.1} parent=5 // pred_check
      _
    $region106: #{mimocom_forward.1} parent=5 // pred_check_branch
      %653 = sbr.rel (%p650) target = $region108
    $region107: #{mimocom_forward.1} parent=5 // pred_region
      %s654 = ssub.s32 %s30, 1
      %p655 = scmp.lt.s32.totalorder %s35, 1
      %s656 = scalar_select %p655, %s35, 1
      %s657 = smul.addr %s656, 10
      %s658 = smul.addr %s657, 4
      %s659 = scalar_lea.vmem %s0, %s658
      %p660 = pneg %p56
      %p661 = pneg %p53
      %p662 = scmp.lt.s32.totalorder %s35, 1
      %s663 = scalar_select %p662, %s35, 1
      %s664 = smul.addr %s663, 4
      %s665 = scalar_lea.vmem %s1, %s664
      %p666 = pneg %p82
      %p667 = pneg %p79
      %p668 = pneg %p103
      %p669 = pneg %p100
      %p670 = pneg %p124
      %p671 = pneg %p121
      %p672 = pneg %p145
      %p673 = pneg %p142
      %p674 = pneg %p166
      %p675 = pneg %p163
      %p676 = pneg %p187
      %p677 = pneg %p184
      %p678 = pneg %p208
      %p679 = pneg %p205
      %p680 = pneg %p229
      %p681 = pneg %p226
      %p682 = pneg %p250
      %p683 = pneg %p247
      %p684 = pneg %p271
      %p685 = pneg %p268
      %p686 = pneg %p292
      %p687 = pneg %p289
      %p688 = pneg %p313
      %p689 = pneg %p310
      %p690 = pneg %p334
      %p691 = pneg %p331
      %p692 = pneg %p355
      %p693 = pneg %p352
      %p694 = pneg %p376
      %p695 = pneg %p373
      %p696 = pneg %p397
      %p697 = pneg %p394
      %p698 = pneg %p418
      %p699 = pneg %p415
      %p700 = pneg %p439
      %p701 = pneg %p436
      %p702 = pneg %p460
      %p703 = pneg %p457
      %p704 = pneg %p481
      %p705 = pneg %p478
      %p706 = pneg %p502
      %p707 = pneg %p499
      %p708 = pneg %p528
      %p709 = pneg %p525
      %p710 = scmp.lt.s32.totalorder %s35, 1
      %s711 = scalar_select %p710, %s35, 1
      %s712 = smul.addr %s711, 8
      %s713 = scalar_lea.vmem %s22, %s712
      %p714 = pneg %p554
      %p715 = pneg %p551
      %p716 = scmp.lt.s32.totalorder %s35, 1
      %s717 = scalar_select %p716, %s35, 1
      %s718 = smul.addr %s717, 10
      %s719 = smul.addr %s718, 8
      %s720 = scalar_lea.vmem %s23, %s719
      %p721 = scmp.lt.s32.totalorder %s35, 1
      %s722 = scalar_select %p721, %s35, 1
      %s723 = smul.addr %s722, 10
      %s724 = smul.addr %s723, 4
      %s725 = scalar_lea.vmem %s0, %s724
      %p726 = scmp.lt.s32.totalorder %s35, 1
      %s727 = scalar_select %p726, %s35, 1
      %s728 = smul.addr %s727, 4
      %s729 = scalar_lea.vmem %s1, %s728
      %p730 = scmp.lt.s32.totalorder %s35, 1
      %s731 = scalar_select %p730, %s35, 1
      %s732 = smul.addr %s731, 8
      %s733 = scalar_lea.vmem %s22, %s732
      %p734 = scmp.lt.s32.totalorder %s35, 1
      %s735 = scalar_select %p734, %s35, 1
      %s736 = smul.addr %s735, 10
      %s737 = smul.addr %s736, 8
      %s738 = scalar_lea.vmem %s23, %s737
      %v740 = vld [vmem:[%s725] sm:$0xf]
      %v741 = vld [vmem:[%s725 + $0x4] sm:$0xf]
      %v742 = vld [vmem:[%s725 + $0x8] sm:$0xf]
      %v743 = vld [vmem:[%s725 + $0xc] sm:$0xf]
      %v744 = vld [vmem:[%s725 + $0x10] sm:$0xf]
      %v745 = vld [vmem:[%s725 + $0x14] sm:$0xf]
      %v746 = vld [vmem:[%s725 + $0x18] sm:$0xf]
      %v747 = vld [vmem:[%s725 + $0x1c] sm:$0xf]
      %v748 = vld [vmem:[%s725 + $0x20] sm:$0xf]
      %v749 = vld [vmem:[%s725 + $0x24] sm:$0xf]
      %v750 = vld [vmem:[%s2] sm:$0xff]
      %v751 = vld [vmem:[%s2 + $0x8] sm:$0xff]
      %v752 = vld [vmem:[%s3] sm:$0xf]
      %v754 = vperm.slane %v752, 0
      %v755 = vperm.slane %v752, 1
      %v756 = vperm.slane %v752, 2
      %v757 = vperm.slane %v752, 3
      %v772 = vunpack.c.l.b16 %v740
      %v773 = vunpack.c.l.b16 %v741
      %v774 = vunpack.c.l.b16 %v742
      %v775 = vunpack.c.l.b16 %v743
      %v776 = vunpack.c.l.b16 %v744
      %v777 = vunpack.c.l.b16 %v745
      %v778 = vunpack.c.l.b16 %v746
      %v779 = vunpack.c.l.b16 %v747
      %v780 = vunpack.c.l.b16 %v748
      %v781 = vunpack.c.l.b16 %v749
      %v782 = vpack.c.b16 %v773, %v772
      %v783 = vpack.c.b16 %v775, %v774
      %v784 = vpack.c.b16 %v777, %v776
      %v785 = vpack.c.b16 %v779, %v778
      %v786 = vpack.c.b16 %v781, %v780
      %v789 = vunpack.c.l.b16 %v750
      %v790 = vunpack.c.h.b16 %v750
      %v791 = vunpack.c.l.b16 %v751
      %v792 = vunpack.c.h.b16 %v751
      %v793 = vpack.c.b16 %v789, %v789
      %v794 = vpack.c.b16 %v790, %v790
      %v795 = vpack.c.b16 %v791, %v791
      %v796 = vpack.c.b16 %v792, %v792
      %vm797 = vcmask 64512
      %v799 = vsel %vm797, %v782, 0
      %v802 = vsel %vm797, %v783, 0
      %v805 = vsel %vm797, %v784, 0
      %v808 = vsel %vm797, %v785, 0
      %v811 = vsel %vm797, %v786, 0
      %vm813 = vcmask 1043456
      %v815 = vsel %vm813, %v793, 0
      %v818 = vsel %vm813, %v794, 0
      %v821 = vsel %vm813, %v795, 0
      %v824 = vsel %vm813, %v796, 0
      %826 = vmatpush.bf16.msra.mxu0 0
      %827 = vmatpush.bf16.msra.mxu0 0
      %828 = vmatpush.bf16.msra.mxu0 0
      %829 = vmatpush.bf16.msra.mxu0 0
      %830 = vmatpush.bf16.msra.mxu0 0
      %831 = vmatpush.bf16.msra.mxu0 0
      %832 = vmatpush.bf16.msra.mxu0 0
      %833 = vmatpush.bf16.msra.mxu0 %v815
      %834 = vmatmul.bf16.gmra.mxu0 %v799
      %v835 = vpop.f32.mrf.mxu0
      %v836 = vadd.f32 %v754, %v835
      %v837 = vpop.f32.mrf.mxu0
      %v838 = vadd.f32 %v754, %v837
      %839 = vmatmul.bf16.gmra.mxu0 %v802
      %v840 = vpop.f32.mrf.mxu0
      %v841 = vadd.f32 %v754, %v840
      %v842 = vpop.f32.mrf.mxu0
      %v843 = vadd.f32 %v754, %v842
      %844 = vmatmul.bf16.gmra.mxu0 %v805
      %v845 = vpop.f32.mrf.mxu0
      %v846 = vadd.f32 %v754, %v845
      %v847 = vpop.f32.mrf.mxu0
      %v848 = vadd.f32 %v754, %v847
      %849 = vmatmul.bf16.gmra.mxu0 %v808
      %v850 = vpop.f32.mrf.mxu0
      %v851 = vadd.f32 %v754, %v850
      %v852 = vpop.f32.mrf.mxu0
      %v853 = vadd.f32 %v754, %v852
      %854 = vmatmul.bf16.gmra.mxu0 %v811
      %v855 = vpop.f32.mrf.mxu0
      %v856 = vadd.f32 %v754, %v855
      %v857 = vpop.f32.mrf.mxu0
      %v858 = vadd.f32 %v754, %v857
      %859 = vdwg.mxu0
      %860 = vmatpush.bf16.msra.mxu0 0
      %861 = vmatpush.bf16.msra.mxu0 0
      %862 = vmatpush.bf16.msra.mxu0 0
      %863 = vmatpush.bf16.msra.mxu0 0
      %864 = vmatpush.bf16.msra.mxu0 0
      %865 = vmatpush.bf16.msra.mxu0 0
      %866 = vmatpush.bf16.msra.mxu0 0
      %867 = vmatpush.bf16.msra.mxu0 %v818
      %868 = vmatmul.bf16.gmra.mxu0 %v799
      %v869 = vpop.f32.mrf.mxu0
      %v870 = vadd.f32 %v755, %v869
      %v871 = vpop.f32.mrf.mxu0
      %v872 = vadd.f32 %v755, %v871
      %873 = vmatmul.bf16.gmra.mxu0 %v802
      %v874 = vpop.f32.mrf.mxu0
      %v875 = vadd.f32 %v755, %v874
      %v876 = vpop.f32.mrf.mxu0
      %v877 = vadd.f32 %v755, %v876
      %878 = vmatmul.bf16.gmra.mxu0 %v805
      %v879 = vpop.f32.mrf.mxu0
      %v880 = vadd.f32 %v755, %v879
      %v881 = vpop.f32.mrf.mxu0
      %v882 = vadd.f32 %v755, %v881
      %883 = vmatmul.bf16.gmra.mxu0 %v808
      %v884 = vpop.f32.mrf.mxu0
      %v885 = vadd.f32 %v755, %v884
      %v886 = vpop.f32.mrf.mxu0
      %v887 = vadd.f32 %v755, %v886
      %888 = vmatmul.bf16.gmra.mxu0 %v811
      %v889 = vpop.f32.mrf.mxu0
      %v890 = vadd.f32 %v755, %v889
      %v891 = vpop.f32.mrf.mxu0
      %v892 = vadd.f32 %v755, %v891
      %893 = vdwg.mxu0
      %894 = vmatpush.bf16.msra.mxu0 0
      %895 = vmatpush.bf16.msra.mxu0 0
      %896 = vmatpush.bf16.msra.mxu0 0
      %897 = vmatpush.bf16.msra.mxu0 0
      %898 = vmatpush.bf16.msra.mxu0 0
      %899 = vmatpush.bf16.msra.mxu0 0
      %900 = vmatpush.bf16.msra.mxu0 0
      %901 = vmatpush.bf16.msra.mxu0 %v821
      %902 = vmatmul.bf16.gmra.mxu0 %v799
      %v903 = vpop.f32.mrf.mxu0
      %v904 = vadd.f32 %v756, %v903
      %v905 = vpop.f32.mrf.mxu0
      %v906 = vadd.f32 %v756, %v905
      %907 = vmatmul.bf16.gmra.mxu0 %v802
      %v908 = vpop.f32.mrf.mxu0
      %v909 = vadd.f32 %v756, %v908
      %v910 = vpop.f32.mrf.mxu0
      %v911 = vadd.f32 %v756, %v910
      %912 = vmatmul.bf16.gmra.mxu0 %v805
      %v913 = vpop.f32.mrf.mxu0
      %v914 = vadd.f32 %v756, %v913
      %v915 = vpop.f32.mrf.mxu0
      %v916 = vadd.f32 %v756, %v915
      %917 = vmatmul.bf16.gmra.mxu0 %v808
      %v918 = vpop.f32.mrf.mxu0
      %v919 = vadd.f32 %v756, %v918
      %v920 = vpop.f32.mrf.mxu0
      %v921 = vadd.f32 %v756, %v920
      %922 = vmatmul.bf16.gmra.mxu0 %v811
      %v923 = vpop.f32.mrf.mxu0
      %v924 = vadd.f32 %v756, %v923
      %v925 = vpop.f32.mrf.mxu0
      %v926 = vadd.f32 %v756, %v925
      %927 = vdwg.mxu0
      %928 = vmatpush.bf16.msra.mxu0 0
      %929 = vmatpush.bf16.msra.mxu0 0
      %930 = vmatpush.bf16.msra.mxu0 0
      %931 = vmatpush.bf16.msra.mxu0 0
      %932 = vmatpush.bf16.msra.mxu0 0
      %933 = vmatpush.bf16.msra.mxu0 0
      %934 = vmatpush.bf16.msra.mxu0 0
      %935 = vmatpush.bf16.msra.mxu0 %v824
      %936 = vmatmul.bf16.gmra.mxu0 %v799
      %v937 = vpop.f32.mrf.mxu0
      %v938 = vadd.f32 %v757, %v937
      %v939 = vpop.f32.mrf.mxu0
      %v940 = vadd.f32 %v757, %v939
      %941 = vmatmul.bf16.gmra.mxu0 %v802
      %v942 = vpop.f32.mrf.mxu0
      %v943 = vadd.f32 %v757, %v942
      %v944 = vpop.f32.mrf.mxu0
      %v945 = vadd.f32 %v757, %v944
      %946 = vmatmul.bf16.gmra.mxu0 %v805
      %v947 = vpop.f32.mrf.mxu0
      %v948 = vadd.f32 %v757, %v947
      %v949 = vpop.f32.mrf.mxu0
      %v950 = vadd.f32 %v757, %v949
      %951 = vmatmul.bf16.gmra.mxu0 %v808
      %v952 = vpop.f32.mrf.mxu0
      %v953 = vadd.f32 %v757, %v952
      %v954 = vpop.f32.mrf.mxu0
      %v955 = vadd.f32 %v757, %v954
      %956 = vmatmul.bf16.gmra.mxu0 %v811
      %v957 = vpop.f32.mrf.mxu0
      %v958 = vadd.f32 %v757, %v957
      %v959 = vpop.f32.mrf.mxu0
      %v960 = vadd.f32 %v757, %v959
      %961 = vdwg.mxu0
      %v962 = vmax.f32 %v836, 0.0
      %v963 = vmax.f32 %v870, 0.0
      %v964 = vmax.f32 %v904, 0.0
      %v965 = vmax.f32 %v938, 0.0
      %v966 = vmax.f32 %v838, 0.0
      %v967 = vmax.f32 %v872, 0.0
      %v968 = vmax.f32 %v906, 0.0
      %v969 = vmax.f32 %v940, 0.0
      %v970 = vmax.f32 %v841, 0.0
      %v971 = vmax.f32 %v875, 0.0
      %v972 = vmax.f32 %v909, 0.0
      %v973 = vmax.f32 %v943, 0.0
      %v974 = vmax.f32 %v843, 0.0
      %v975 = vmax.f32 %v877, 0.0
      %v976 = vmax.f32 %v911, 0.0
      %v977 = vmax.f32 %v945, 0.0
      %v978 = vmax.f32 %v846, 0.0
      %v979 = vmax.f32 %v880, 0.0
      %v980 = vmax.f32 %v914, 0.0
      %v981 = vmax.f32 %v948, 0.0
      %v982 = vmax.f32 %v848, 0.0
      %v983 = vmax.f32 %v882, 0.0
      %v984 = vmax.f32 %v916, 0.0
      %v985 = vmax.f32 %v950, 0.0
      %v986 = vmax.f32 %v851, 0.0
      %v987 = vmax.f32 %v885, 0.0
      %v988 = vmax.f32 %v919, 0.0
      %v989 = vmax.f32 %v953, 0.0
      %v990 = vmax.f32 %v853, 0.0
      %v991 = vmax.f32 %v887, 0.0
      %v992 = vmax.f32 %v921, 0.0
      %v993 = vmax.f32 %v955, 0.0
      %v994 = vmax.f32 %v856, 0.0
      %v995 = vmax.f32 %v890, 0.0
      %v996 = vmax.f32 %v924, 0.0
      %v997 = vmax.f32 %v958, 0.0
      %v998 = vmax.f32 %v858, 0.0
      %v999 = vmax.f32 %v892, 0.0
      %v1000 = vmax.f32 %v926, 0.0
      %v1001 = vmax.f32 %v960, 0.0
      %v1002 = vpack.c.bf16 %v966, %v962
      %v1003 = vpack.c.bf16 %v967, %v963
      %v1004 = vpack.c.bf16 %v968, %v964
      %v1005 = vpack.c.bf16 %v969, %v965
      %v1006 = vpack.c.bf16 %v974, %v970
      %v1007 = vpack.c.bf16 %v975, %v971
      %v1008 = vpack.c.bf16 %v976, %v972
      %v1009 = vpack.c.bf16 %v977, %v973
      %v1010 = vpack.c.bf16 %v982, %v978
      %v1011 = vpack.c.bf16 %v983, %v979
      %v1012 = vpack.c.bf16 %v984, %v980
      %v1013 = vpack.c.bf16 %v985, %v981
      %v1014 = vpack.c.bf16 %v990, %v986
      %v1015 = vpack.c.bf16 %v991, %v987
      %v1016 = vpack.c.bf16 %v992, %v988
      %v1017 = vpack.c.bf16 %v993, %v989
      %v1018 = vpack.c.bf16 %v998, %v994
      %v1019 = vpack.c.bf16 %v999, %v995
      %v1020 = vpack.c.bf16 %v1000, %v996
      %v1021 = vpack.c.bf16 %v1001, %v997
      %v1022 = vld [vmem:[%s20] sm:$0xf]
      %v1023 = vld [vmem:[%s20 + $0x4] sm:$0xf]
      %v1024 = vld [vmem:[%s20 + $0x8] sm:$0xf]
      %v1025 = vld [vmem:[%s20 + $0xc] sm:$0xf]
      %v1026 = vld [vmem:[%s20 + $0x10] sm:$0xf]
      %v1027 = vld [vmem:[%s20 + $0x14] sm:$0xf]
      %v1028 = vld [vmem:[%s20 + $0x18] sm:$0xf]
      %v1029 = vld [vmem:[%s20 + $0x1c] sm:$0xf]
      %v1030 = vld [vmem:[%s20 + $0x20] sm:$0xf]
      %v1031 = vld [vmem:[%s20 + $0x24] sm:$0xf]
      %v1032 = vld [vmem:[%s20 + $0x28] sm:$0xf]
      %v1033 = vld [vmem:[%s20 + $0x2c] sm:$0xf]
      %v1034 = vld [vmem:[%s20 + $0x30] sm:$0xf]
      %v1035 = vld [vmem:[%s20 + $0x34] sm:$0xf]
      %v1036 = vld [vmem:[%s20 + $0x38] sm:$0xf]
      %v1037 = vld [vmem:[%s20 + $0x3c] sm:$0xf]
      %v1038 = vld [vmem:[%s20 + $0x40] sm:$0xf]
      %v1039 = vld [vmem:[%s20 + $0x44] sm:$0xf]
      %v1040 = vld [vmem:[%s20 + $0x48] sm:$0xf]
      %v1041 = vld [vmem:[%s20 + $0x4c] sm:$0xf]
      %v1042 = vld [vmem:[%s20 + $0x50] sm:$0xf]
      %v1043 = vld [vmem:[%s20 + $0x54] sm:$0xf]
      %v1044 = vld [vmem:[%s20 + $0x58] sm:$0xf]
      %v1045 = vld [vmem:[%s20 + $0x5c] sm:$0xf]
      %v1046 = vld [vmem:[%s20 + $0x60] sm:$0xf]
      %v1047 = vld [vmem:[%s20 + $0x64] sm:$0xf]
      %v1048 = vld [vmem:[%s20 + $0x68] sm:$0xf]
      %v1049 = vld [vmem:[%s20 + $0x6c] sm:$0xf]
      %v1050 = vld [vmem:[%s20 + $0x70] sm:$0xf]
      %v1051 = vld [vmem:[%s20 + $0x74] sm:$0xf]
      %v1052 = vld [vmem:[%s20 + $0x78] sm:$0xf]
      %v1053 = vld [vmem:[%s20 + $0x7c] sm:$0xf]
      %v1054 = vld [vmem:[%s20 + $0x80] sm:$0xf]
      %v1055 = vld [vmem:[%s20 + $0x84] sm:$0xf]
      %v1056 = vld [vmem:[%s20 + $0x88] sm:$0xf]
      %v1057 = vld [vmem:[%s20 + $0x8c] sm:$0xf]
      %v1058 = vld [vmem:[%s20 + $0x90] sm:$0xf]
      %v1059 = vld [vmem:[%s20 + $0x94] sm:$0xf]
      %v1060 = vld [vmem:[%s20 + $0x98] sm:$0xf]
      %v1061 = vld [vmem:[%s20 + $0x9c] sm:$0xf]
      %v1062 = vld [vmem:[%s20 + $0xa0] sm:$0xf]
      %v1063 = vld [vmem:[%s20 + $0xa4] sm:$0xf]
      %v1064 = vld [vmem:[%s20 + $0xa8] sm:$0xf]
      %v1065 = vld [vmem:[%s20 + $0xac] sm:$0xf]
      %v1066 = vld [vmem:[%s20 + $0xb0] sm:$0xf]
      %v1067 = vld [vmem:[%s20 + $0xb4] sm:$0xf]
      %v1068 = vld [vmem:[%s20 + $0xb8] sm:$0xf]
      %v1069 = vld [vmem:[%s20 + $0xbc] sm:$0xf]
      %v1070 = vld [vmem:[%s20 + $0xc0] sm:$0xf]
      %v1071 = vld [vmem:[%s20 + $0xc4] sm:$0xf]
      %v1072 = vld [vmem:[%s20 + $0xc8] sm:$0xf]
      %v1073 = vld [vmem:[%s20 + $0xcc] sm:$0xf]
      %v1074 = vld [vmem:[%s20 + $0xd0] sm:$0xf]
      %v1075 = vld [vmem:[%s20 + $0xd4] sm:$0xf]
      %v1076 = vld [vmem:[%s20 + $0xd8] sm:$0xf]
      %v1077 = vld [vmem:[%s20 + $0xdc] sm:$0xf]
      %v1078 = vld [vmem:[%s20 + $0xe0] sm:$0xf]
      %v1079 = vld [vmem:[%s20 + $0xe4] sm:$0xf]
      %v1080 = vld [vmem:[%s20 + $0xe8] sm:$0xf]
      %v1081 = vld [vmem:[%s20 + $0xec] sm:$0xf]
      %v1082 = vld [vmem:[%s20 + $0xf0] sm:$0xf]
      %v1083 = vld [vmem:[%s20 + $0xf4] sm:$0xf]
      %v1084 = vld [vmem:[%s20 + $0xf8] sm:$0xf]
      %v1085 = vld [vmem:[%s20 + $0xfc] sm:$0xf]
      %v1150 = vunpack.c.l.b16 %v1022
      %v1151 = vunpack.c.l.b16 %v1023
      %v1152 = vunpack.c.l.b16 %v1024
      %v1153 = vunpack.c.l.b16 %v1025
      %v1154 = vunpack.c.l.b16 %v1026
      %v1155 = vunpack.c.l.b16 %v1027
      %v1156 = vunpack.c.l.b16 %v1028
      %v1157 = vunpack.c.l.b16 %v1029
      %v1158 = vunpack.c.l.b16 %v1030
      %v1159 = vunpack.c.l.b16 %v1031
      %v1160 = vunpack.c.l.b16 %v1032
      %v1161 = vunpack.c.l.b16 %v1033
      %v1162 = vunpack.c.l.b16 %v1034
      %v1163 = vunpack.c.l.b16 %v1035
      %v1164 = vunpack.c.l.b16 %v1036
      %v1165 = vunpack.c.l.b16 %v1037
      %v1166 = vunpack.c.l.b16 %v1038
      %v1167 = vunpack.c.l.b16 %v1039
      %v1168 = vunpack.c.l.b16 %v1040
      %v1169 = vunpack.c.l.b16 %v1041
      %v1170 = vunpack.c.l.b16 %v1042
      %v1171 = vunpack.c.l.b16 %v1043
      %v1172 = vunpack.c.l.b16 %v1044
      %v1173 = vunpack.c.l.b16 %v1045
      %v1174 = vunpack.c.l.b16 %v1046
      %v1175 = vunpack.c.l.b16 %v1047
      %v1176 = vunpack.c.l.b16 %v1048
      %v1177 = vunpack.c.l.b16 %v1049
      %v1178 = vunpack.c.l.b16 %v1050
      %v1179 = vunpack.c.l.b16 %v1051
      %v1180 = vunpack.c.l.b16 %v1052
      %v1181 = vunpack.c.l.b16 %v1053
      %v1182 = vunpack.c.l.b16 %v1054
      %v1183 = vunpack.c.l.b16 %v1055
      %v1184 = vunpack.c.l.b16 %v1056
      %v1185 = vunpack.c.l.b16 %v1057
      %v1186 = vunpack.c.l.b16 %v1058
      %v1187 = vunpack.c.l.b16 %v1059
      %v1188 = vunpack.c.l.b16 %v1060
      %v1189 = vunpack.c.l.b16 %v1061
      %v1190 = vunpack.c.l.b16 %v1062
      %v1191 = vunpack.c.l.b16 %v1063
      %v1192 = vunpack.c.l.b16 %v1064
      %v1193 = vunpack.c.l.b16 %v1065
      %v1194 = vunpack.c.l.b16 %v1066
      %v1195 = vunpack.c.l.b16 %v1067
      %v1196 = vunpack.c.l.b16 %v1068
      %v1197 = vunpack.c.l.b16 %v1069
      %v1198 = vunpack.c.l.b16 %v1070
      %v1199 = vunpack.c.l.b16 %v1071
      %v1200 = vunpack.c.l.b16 %v1072
      %v1201 = vunpack.c.l.b16 %v1073
      %v1202 = vunpack.c.l.b16 %v1074
      %v1203 = vunpack.c.l.b16 %v1075
      %v1204 = vunpack.c.l.b16 %v1076
      %v1205 = vunpack.c.l.b16 %v1077
      %v1206 = vunpack.c.l.b16 %v1078
      %v1207 = vunpack.c.l.b16 %v1079
      %v1208 = vunpack.c.l.b16 %v1080
      %v1209 = vunpack.c.l.b16 %v1081
      %v1210 = vunpack.c.l.b16 %v1082
      %v1211 = vunpack.c.l.b16 %v1083
      %v1212 = vunpack.c.l.b16 %v1084
      %v1213 = vunpack.c.l.b16 %v1085
      %v1214 = vpack.c.b16 %v1151, %v1150
      %v1215 = vpack.c.b16 %v1153, %v1152
      %v1216 = vpack.c.b16 %v1155, %v1154
      %v1217 = vpack.c.b16 %v1157, %v1156
      %v1218 = vpack.c.b16 %v1159, %v1158
      %v1219 = vpack.c.b16 %v1161, %v1160
      %v1220 = vpack.c.b16 %v1163, %v1162
      %v1221 = vpack.c.b16 %v1165, %v1164
      %v1222 = vpack.c.b16 %v1167, %v1166
      %v1223 = vpack.c.b16 %v1169, %v1168
      %v1224 = vpack.c.b16 %v1171, %v1170
      %v1225 = vpack.c.b16 %v1173, %v1172
      %v1226 = vpack.c.b16 %v1175, %v1174
      %v1227 = vpack.c.b16 %v1177, %v1176
      %v1228 = vpack.c.b16 %v1179, %v1178
      %v1229 = vpack.c.b16 %v1181, %v1180
      %v1230 = vpack.c.b16 %v1183, %v1182
      %v1231 = vpack.c.b16 %v1185, %v1184
      %v1232 = vpack.c.b16 %v1187, %v1186
      %v1233 = vpack.c.b16 %v1189, %v1188
      %v1234 = vpack.c.b16 %v1191, %v1190
      %v1235 = vpack.c.b16 %v1193, %v1192
      %v1236 = vpack.c.b16 %v1195, %v1194
      %v1237 = vpack.c.b16 %v1197, %v1196
      %v1238 = vpack.c.b16 %v1199, %v1198
      %v1239 = vpack.c.b16 %v1201, %v1200
      %v1240 = vpack.c.b16 %v1203, %v1202
      %v1241 = vpack.c.b16 %v1205, %v1204
      %v1242 = vpack.c.b16 %v1207, %v1206
      %v1243 = vpack.c.b16 %v1209, %v1208
      %v1244 = vpack.c.b16 %v1211, %v1210
      %v1245 = vpack.c.b16 %v1213, %v1212
      %1278 = vmatpush.bf16.msra.mxu0 %v1221
      %1279 = vmatpush.bf16.msra.mxu0 %v1220
      %1280 = vmatpush.bf16.msra.mxu0 %v1219
      %1281 = vmatpush.bf16.msra.mxu0 %v1218
      %1282 = vmatpush.bf16.msra.mxu0 %v1217
      %1283 = vmatpush.bf16.msra.mxu0 %v1216
      %1284 = vmatpush.bf16.msra.mxu0 %v1215
      %1285 = vmatpush.bf16.msra.mxu0 %v1214
      %1286 = vmatmul.bf16.gmra.mxu0 %v1002
      %v1287 = vpop.f32.mrf.mxu0
      %v1288 = vadd.f32 0.0, %v1287
      %v1289 = vpop.f32.mrf.mxu0
      %v1290 = vadd.f32 0.0, %v1289
      %1291 = vmatmul.bf16.gmra.mxu0 %v1006
      %v1292 = vpop.f32.mrf.mxu0
      %v1293 = vadd.f32 0.0, %v1292
      %v1294 = vpop.f32.mrf.mxu0
      %v1295 = vadd.f32 0.0, %v1294
      %1296 = vmatmul.bf16.gmra.mxu0 %v1010
      %v1297 = vpop.f32.mrf.mxu0
      %v1298 = vadd.f32 0.0, %v1297
      %v1299 = vpop.f32.mrf.mxu0
      %v1300 = vadd.f32 0.0, %v1299
      %1301 = vmatmul.bf16.gmra.mxu0 %v1014
      %v1302 = vpop.f32.mrf.mxu0
      %v1303 = vadd.f32 0.0, %v1302
      %v1304 = vpop.f32.mrf.mxu0
      %v1305 = vadd.f32 0.0, %v1304
      %1306 = vmatmul.bf16.gmra.mxu0 %v1018
      %v1307 = vpop.f32.mrf.mxu0
      %v1308 = vadd.f32 0.0, %v1307
      %v1309 = vpop.f32.mrf.mxu0
      %v1310 = vadd.f32 0.0, %v1309
      %1311 = vdwg.mxu0
      %1312 = vmatpush.bf16.msra.mxu0 %v1229
      %1313 = vmatpush.bf16.msra.mxu0 %v1228
      %1314 = vmatpush.bf16.msra.mxu0 %v1227
      %1315 = vmatpush.bf16.msra.mxu0 %v1226
      %1316 = vmatpush.bf16.msra.mxu0 %v1225
      %1317 = vmatpush.bf16.msra.mxu0 %v1224
      %1318 = vmatpush.bf16.msra.mxu0 %v1223
      %1319 = vmatpush.bf16.msra.mxu0 %v1222
      %1320 = vmatmul.bf16.gmra.mxu0 %v1003
      %v1321 = vpop.f32.mrf.mxu0
      %v1322 = vadd.f32 %v1288, %v1321
      %v1323 = vpop.f32.mrf.mxu0
      %v1324 = vadd.f32 %v1290, %v1323
      %1325 = vmatmul.bf16.gmra.mxu0 %v1007
      %v1326 = vpop.f32.mrf.mxu0
      %v1327 = vadd.f32 %v1293, %v1326
      %v1328 = vpop.f32.mrf.mxu0
      %v1329 = vadd.f32 %v1295, %v1328
      %1330 = vmatmul.bf16.gmra.mxu0 %v1011
      %v1331 = vpop.f32.mrf.mxu0
      %v1332 = vadd.f32 %v1298, %v1331
      %v1333 = vpop.f32.mrf.mxu0
      %v1334 = vadd.f32 %v1300, %v1333
      %1335 = vmatmul.bf16.gmra.mxu0 %v1015
      %v1336 = vpop.f32.mrf.mxu0
      %v1337 = vadd.f32 %v1303, %v1336
      %v1338 = vpop.f32.mrf.mxu0
      %v1339 = vadd.f32 %v1305, %v1338
      %1340 = vmatmul.bf16.gmra.mxu0 %v1019
      %v1341 = vpop.f32.mrf.mxu0
      %v1342 = vadd.f32 %v1308, %v1341
      %v1343 = vpop.f32.mrf.mxu0
      %v1344 = vadd.f32 %v1310, %v1343
      %1345 = vdwg.mxu0
      %1346 = vmatpush.bf16.msra.mxu0 %v1237
      %1347 = vmatpush.bf16.msra.mxu0 %v1236
      %1348 = vmatpush.bf16.msra.mxu0 %v1235
      %1349 = vmatpush.bf16.msra.mxu0 %v1234
      %1350 = vmatpush.bf16.msra.mxu0 %v1233
      %1351 = vmatpush.bf16.msra.mxu0 %v1232
      %1352 = vmatpush.bf16.msra.mxu0 %v1231
      %1353 = vmatpush.bf16.msra.mxu0 %v1230
      %1354 = vmatmul.bf16.gmra.mxu0 %v1004
      %v1355 = vpop.f32.mrf.mxu0
      %v1356 = vadd.f32 %v1322, %v1355
      %v1357 = vpop.f32.mrf.mxu0
      %v1358 = vadd.f32 %v1324, %v1357
      %1359 = vmatmul.bf16.gmra.mxu0 %v1008
      %v1360 = vpop.f32.mrf.mxu0
      %v1361 = vadd.f32 %v1327, %v1360
      %v1362 = vpop.f32.mrf.mxu0
      %v1363 = vadd.f32 %v1329, %v1362
      %1364 = vmatmul.bf16.gmra.mxu0 %v1012
      %v1365 = vpop.f32.mrf.mxu0
      %v1366 = vadd.f32 %v1332, %v1365
      %v1367 = vpop.f32.mrf.mxu0
      %v1368 = vadd.f32 %v1334, %v1367
      %1369 = vmatmul.bf16.gmra.mxu0 %v1016
      %v1370 = vpop.f32.mrf.mxu0
      %v1371 = vadd.f32 %v1337, %v1370
      %v1372 = vpop.f32.mrf.mxu0
      %v1373 = vadd.f32 %v1339, %v1372
      %1374 = vmatmul.bf16.gmra.mxu0 %v1020
      %v1375 = vpop.f32.mrf.mxu0
      %v1376 = vadd.f32 %v1342, %v1375
      %v1377 = vpop.f32.mrf.mxu0
      %v1378 = vadd.f32 %v1344, %v1377
      %1379 = vdwg.mxu0
      %1380 = vmatpush.bf16.msra.mxu0 %v1245
      %1381 = vmatpush.bf16.msra.mxu0 %v1244
      %1382 = vmatpush.bf16.msra.mxu0 %v1243
      %1383 = vmatpush.bf16.msra.mxu0 %v1242
      %1384 = vmatpush.bf16.msra.mxu0 %v1241
      %1385 = vmatpush.bf16.msra.mxu0 %v1240
      %1386 = vmatpush.bf16.msra.mxu0 %v1239
      %1387 = vmatpush.bf16.msra.mxu0 %v1238
      %1388 = vmatmul.bf16.gmra.mxu0 %v1005
      %v1389 = vpop.f32.mrf.mxu0
      %v1390 = vadd.f32 %v1356, %v1389
      %v1391 = vpop.f32.mrf.mxu0
      %v1392 = vadd.f32 %v1358, %v1391
      %1393 = vmatmul.bf16.gmra.mxu0 %v1009
      %v1394 = vpop.f32.mrf.mxu0
      %v1395 = vadd.f32 %v1361, %v1394
      %v1396 = vpop.f32.mrf.mxu0
      %v1397 = vadd.f32 %v1363, %v1396
      %1398 = vmatmul.bf16.gmra.mxu0 %v1013
      %v1399 = vpop.f32.mrf.mxu0
      %v1400 = vadd.f32 %v1366, %v1399
      %v1401 = vpop.f32.mrf.mxu0
      %v1402 = vadd.f32 %v1368, %v1401
      %1403 = vmatmul.bf16.gmra.mxu0 %v1017
      %v1404 = vpop.f32.mrf.mxu0
      %v1405 = vadd.f32 %v1371, %v1404
      %v1406 = vpop.f32.mrf.mxu0
      %v1407 = vadd.f32 %v1373, %v1406
      %1408 = vmatmul.bf16.gmra.mxu0 %v1021
      %v1409 = vpop.f32.mrf.mxu0
      %v1410 = vadd.f32 %v1376, %v1409
      %v1411 = vpop.f32.mrf.mxu0
      %v1412 = vadd.f32 %v1378, %v1411
      %1413 = vdwg.mxu0
      %v1414 = vld [vmem:[%s729] sm:$0x7]
      %v1415 = vld [vmem:[%s4] sm:$0xff]
      %v1416 = vld [vmem:[%s5] sm:$0x3]
      %v1418 = vperm.slane %v1416, 0
      %v1419 = vperm.slane %v1416, 1
      %v1423 = vunpack.c.l.b16 %v1415
      %v1424 = vunpack.c.h.b16 %v1415
      %v1425 = vpack.c.b16 %v1423, %v1423
      %v1426 = vpack.c.b16 %v1424, %v1424
      %v1428 = vsel %vm797, %v1414, 0
      %v1431 = vsel %vm813, %v1425, 0
      %v1434 = vsel %vm813, %v1426, 0
      %1436 = vmatpush.bf16.msra.mxu0 0
      %1437 = vmatpush.bf16.msra.mxu0 0
      %1438 = vmatpush.bf16.msra.mxu0 0
      %1439 = vmatpush.bf16.msra.mxu0 0
      %1440 = vmatpush.bf16.msra.mxu0 0
      %1441 = vmatpush.bf16.msra.mxu0 0
      %1442 = vmatpush.bf16.msra.mxu0 0
      %1443 = vmatpush.bf16.msra.mxu0 %v1431
      %1444 = vmatmul.bf16.gmra.mxu0 %v1428
      %v1445 = vpop.f32.mrf.mxu0
      %v1446 = vadd.f32 %v1418, %v1445
      %v1447 = vpop.f32.mrf.mxu0
      %1448 = vdwg.mxu0
      %1449 = vmatpush.bf16.msra.mxu0 0
      %1450 = vmatpush.bf16.msra.mxu0 0
      %1451 = vmatpush.bf16.msra.mxu0 0
      %1452 = vmatpush.bf16.msra.mxu0 0
      %1453 = vmatpush.bf16.msra.mxu0 0
      %1454 = vmatpush.bf16.msra.mxu0 0
      %1455 = vmatpush.bf16.msra.mxu0 0
      %1456 = vmatpush.bf16.msra.mxu0 %v1434
      %1457 = vmatmul.bf16.gmra.mxu0 %v1428
      %v1458 = vpop.f32.mrf.mxu0
      %v1459 = vadd.f32 %v1419, %v1458
      %v1460 = vpop.f32.mrf.mxu0
      %1461 = vdwg.mxu0
      %v1462 = vmax.f32 %v1446, 0.0
      %v1463 = vmax.f32 %v1459, 0.0
      %v1464 = vpack.c.bf16 %v1462, %v1462
      %v1465 = vpack.c.bf16 %v1463, %v1463
      %v1466 = vld [vmem:[%s6] sm:$0xff]
      %v1467 = vld [vmem:[%s6 + $0x8] sm:$0xff]
      %v1468 = vld [vmem:[%s6 + $0x10] sm:$0xff]
      %v1469 = vld [vmem:[%s6 + $0x18] sm:$0xff]
      %v1470 = vld [vmem:[%s6 + $0x20] sm:$0xff]
      %v1471 = vld [vmem:[%s6 + $0x28] sm:$0xff]
      %v1472 = vld [vmem:[%s6 + $0x30] sm:$0xff]
      %v1473 = vld [vmem:[%s6 + $0x38] sm:$0xff]
      %v1474 = vld [vmem:[%s6 + $0x40] sm:$0xff]
      %v1475 = vld [vmem:[%s6 + $0x48] sm:$0xff]
      %v1476 = vld [vmem:[%s6 + $0x50] sm:$0xff]
      %v1477 = vld [vmem:[%s6 + $0x58] sm:$0xff]
      %v1478 = vld [vmem:[%s6 + $0x60] sm:$0xff]
      %v1479 = vld [vmem:[%s6 + $0x68] sm:$0xff]
      %v1480 = vld [vmem:[%s6 + $0x70] sm:$0xff]
      %v1481 = vld [vmem:[%s6 + $0x78] sm:$0xff]
      %v1482 = vld [vmem:[%s6 + $0x80] sm:$0xff]
      %v1483 = vld [vmem:[%s6 + $0x88] sm:$0xff]
      %v1484 = vld [vmem:[%s6 + $0x90] sm:$0xff]
      %v1485 = vld [vmem:[%s6 + $0x98] sm:$0xff]
      %v1486 = vld [vmem:[%s6 + $0xa0] sm:$0xff]
      %v1487 = vld [vmem:[%s6 + $0xa8] sm:$0xff]
      %v1488 = vld [vmem:[%s6 + $0xb0] sm:$0xff]
      %v1489 = vld [vmem:[%s6 + $0xb8] sm:$0xff]
      %v1490 = vld [vmem:[%s6 + $0xc0] sm:$0xff]
      %v1491 = vld [vmem:[%s6 + $0xc8] sm:$0xff]
      %v1492 = vld [vmem:[%s6 + $0xd0] sm:$0xff]
      %v1493 = vld [vmem:[%s6 + $0xd8] sm:$0xff]
      %v1494 = vld [vmem:[%s6 + $0xe0] sm:$0xff]
      %v1495 = vld [vmem:[%s6 + $0xe8] sm:$0xff]
      %v1496 = vld [vmem:[%s6 + $0xf0] sm:$0xff]
      %v1497 = vld [vmem:[%s6 + $0xf8] sm:$0xff]
      %v1498 = vld [vmem:[%s7] sm:$0x3]
      %v1500 = vperm.slane %v1498, 0
      %v1501 = vperm.slane %v1498, 1
      %v1536 = vunpack.c.l.b16 %v1466
      %v1537 = vunpack.c.h.b16 %v1466
      %v1538 = vunpack.c.l.b16 %v1467
      %v1539 = vunpack.c.h.b16 %v1467
      %v1540 = vunpack.c.l.b16 %v1468
      %v1541 = vunpack.c.h.b16 %v1468
      %v1542 = vunpack.c.l.b16 %v1469
      %v1543 = vunpack.c.h.b16 %v1469
      %v1544 = vunpack.c.l.b16 %v1470
      %v1545 = vunpack.c.h.b16 %v1470
      %v1546 = vunpack.c.l.b16 %v1471
      %v1547 = vunpack.c.h.b16 %v1471
      %v1548 = vunpack.c.l.b16 %v1472
      %v1549 = vunpack.c.h.b16 %v1472
      %v1550 = vunpack.c.l.b16 %v1473
      %v1551 = vunpack.c.h.b16 %v1473
      %v1552 = vunpack.c.l.b16 %v1474
      %v1553 = vunpack.c.h.b16 %v1474
      %v1554 = vunpack.c.l.b16 %v1475
      %v1555 = vunpack.c.h.b16 %v1475
      %v1556 = vunpack.c.l.b16 %v1476
      %v1557 = vunpack.c.h.b16 %v1476
      %v1558 = vunpack.c.l.b16 %v1477
      %v1559 = vunpack.c.h.b16 %v1477
      %v1560 = vunpack.c.l.b16 %v1478
      %v1561 = vunpack.c.h.b16 %v1478
      %v1562 = vunpack.c.l.b16 %v1479
      %v1563 = vunpack.c.h.b16 %v1479
      %v1564 = vunpack.c.l.b16 %v1480
      %v1565 = vunpack.c.h.b16 %v1480
      %v1566 = vunpack.c.l.b16 %v1481
      %v1567 = vunpack.c.h.b16 %v1481
      %v1568 = vunpack.c.l.b16 %v1482
      %v1569 = vunpack.c.h.b16 %v1482
      %v1570 = vunpack.c.l.b16 %v1483
      %v1571 = vunpack.c.h.b16 %v1483
      %v1572 = vunpack.c.l.b16 %v1484
      %v1573 = vunpack.c.h.b16 %v1484
      %v1574 = vunpack.c.l.b16 %v1485
      %v1575 = vunpack.c.h.b16 %v1485
      %v1576 = vunpack.c.l.b16 %v1486
      %v1577 = vunpack.c.h.b16 %v1486
      %v1578 = vunpack.c.l.b16 %v1487
      %v1579 = vunpack.c.h.b16 %v1487
      %v1580 = vunpack.c.l.b16 %v1488
      %v1581 = vunpack.c.h.b16 %v1488
      %v1582 = vunpack.c.l.b16 %v1489
      %v1583 = vunpack.c.h.b16 %v1489
      %v1584 = vunpack.c.l.b16 %v1490
      %v1585 = vunpack.c.h.b16 %v1490
      %v1586 = vunpack.c.l.b16 %v1491
      %v1587 = vunpack.c.h.b16 %v1491
      %v1588 = vunpack.c.l.b16 %v1492
      %v1589 = vunpack.c.h.b16 %v1492
      %v1590 = vunpack.c.l.b16 %v1493
      %v1591 = vunpack.c.h.b16 %v1493
      %v1592 = vunpack.c.l.b16 %v1494
      %v1593 = vunpack.c.h.b16 %v1494
      %v1594 = vunpack.c.l.b16 %v1495
      %v1595 = vunpack.c.h.b16 %v1495
      %v1596 = vunpack.c.l.b16 %v1496
      %v1597 = vunpack.c.h.b16 %v1496
      %v1598 = vunpack.c.l.b16 %v1497
      %v1599 = vunpack.c.h.b16 %v1497
      %v1600 = vpack.c.b16 %v1538, %v1536
      %v1601 = vpack.c.b16 %v1539, %v1537
      %v1602 = vpack.c.b16 %v1542, %v1540
      %v1603 = vpack.c.b16 %v1543, %v1541
      %v1604 = vpack.c.b16 %v1546, %v1544
      %v1605 = vpack.c.b16 %v1547, %v1545
      %v1606 = vpack.c.b16 %v1550, %v1548
      %v1607 = vpack.c.b16 %v1551, %v1549
      %v1608 = vpack.c.b16 %v1554, %v1552
      %v1609 = vpack.c.b16 %v1555, %v1553
      %v1610 = vpack.c.b16 %v1558, %v1556
      %v1611 = vpack.c.b16 %v1559, %v1557
      %v1612 = vpack.c.b16 %v1562, %v1560
      %v1613 = vpack.c.b16 %v1563, %v1561
      %v1614 = vpack.c.b16 %v1566, %v1564
      %v1615 = vpack.c.b16 %v1567, %v1565
      %v1616 = vpack.c.b16 %v1570, %v1568
      %v1617 = vpack.c.b16 %v1571, %v1569
      %v1618 = vpack.c.b16 %v1574, %v1572
      %v1619 = vpack.c.b16 %v1575, %v1573
      %v1620 = vpack.c.b16 %v1578, %v1576
      %v1621 = vpack.c.b16 %v1579, %v1577
      %v1622 = vpack.c.b16 %v1582, %v1580
      %v1623 = vpack.c.b16 %v1583, %v1581
      %v1624 = vpack.c.b16 %v1586, %v1584
      %v1625 = vpack.c.b16 %v1587, %v1585
      %v1626 = vpack.c.b16 %v1590, %v1588
      %v1627 = vpack.c.b16 %v1591, %v1589
      %v1628 = vpack.c.b16 %v1594, %v1592
      %v1629 = vpack.c.b16 %v1595, %v1593
      %v1630 = vpack.c.b16 %v1598, %v1596
      %v1631 = vpack.c.b16 %v1599, %v1597
      %1664 = vmatpush.bf16.msra.mxu0 %v1614
      %1665 = vmatpush.bf16.msra.mxu0 %v1612
      %1666 = vmatpush.bf16.msra.mxu0 %v1610
      %1667 = vmatpush.bf16.msra.mxu0 %v1608
      %1668 = vmatpush.bf16.msra.mxu0 %v1606
      %1669 = vmatpush.bf16.msra.mxu0 %v1604
      %1670 = vmatpush.bf16.msra.mxu0 %v1602
      %1671 = vmatpush.bf16.msra.mxu0 %v1600
      %1672 = vmatmul.bf16.gmra.mxu0 %v1464
      %v1673 = vpop.f32.mrf.mxu0
      %v1674 = vadd.f32 %v1500, %v1673
      %v1675 = vpop.f32.mrf.mxu0
      %1676 = vdwg.mxu0
      %1677 = vmatpush.bf16.msra.mxu0 %v1630
      %1678 = vmatpush.bf16.msra.mxu0 %v1628
      %1679 = vmatpush.bf16.msra.mxu0 %v1626
      %1680 = vmatpush.bf16.msra.mxu0 %v1624
      %1681 = vmatpush.bf16.msra.mxu0 %v1622
      %1682 = vmatpush.bf16.msra.mxu0 %v1620
      %1683 = vmatpush.bf16.msra.mxu0 %v1618
      %1684 = vmatpush.bf16.msra.mxu0 %v1616
      %1685 = vmatmul.bf16.gmra.mxu0 %v1465
      %v1686 = vpop.f32.mrf.mxu0
      %v1687 = vadd.f32 %v1674, %v1686
      %v1688 = vpop.f32.mrf.mxu0
      %1689 = vdwg.mxu0
      %1690 = vmatpush.bf16.msra.mxu0 %v1615
      %1691 = vmatpush.bf16.msra.mxu0 %v1613
      %1692 = vmatpush.bf16.msra.mxu0 %v1611
      %1693 = vmatpush.bf16.msra.mxu0 %v1609
      %1694 = vmatpush.bf16.msra.mxu0 %v1607
      %1695 = vmatpush.bf16.msra.mxu0 %v1605
      %1696 = vmatpush.bf16.msra.mxu0 %v1603
      %1697 = vmatpush.bf16.msra.mxu0 %v1601
      %1698 = vmatmul.bf16.gmra.mxu0 %v1464
      %v1699 = vpop.f32.mrf.mxu0
      %v1700 = vadd.f32 %v1501, %v1699
      %v1701 = vpop.f32.mrf.mxu0
      %1702 = vdwg.mxu0
      %1703 = vmatpush.bf16.msra.mxu0 %v1631
      %1704 = vmatpush.bf16.msra.mxu0 %v1629
      %1705 = vmatpush.bf16.msra.mxu0 %v1627
      %1706 = vmatpush.bf16.msra.mxu0 %v1625
      %1707 = vmatpush.bf16.msra.mxu0 %v1623
      %1708 = vmatpush.bf16.msra.mxu0 %v1621
      %1709 = vmatpush.bf16.msra.mxu0 %v1619
      %1710 = vmatpush.bf16.msra.mxu0 %v1617
      %1711 = vmatmul.bf16.gmra.mxu0 %v1465
      %v1712 = vpop.f32.mrf.mxu0
      %v1713 = vadd.f32 %v1700, %v1712
      %v1714 = vpop.f32.mrf.mxu0
      %1715 = vdwg.mxu0
      %v1716 = vmax.f32 %v1687, 0.0
      %v1717 = vmax.f32 %v1713, 0.0
      %v1718 = vpack.c.bf16 %v1716, %v1716
      %v1719 = vpack.c.bf16 %v1717, %v1717
      %v1720 = vld [vmem:[%s8] sm:$0xf]
      %v1721 = vld [vmem:[%s8 + $0x4] sm:$0xf]
      %v1722 = vld [vmem:[%s8 + $0x8] sm:$0xf]
      %v1723 = vld [vmem:[%s8 + $0xc] sm:$0xf]
      %v1724 = vld [vmem:[%s8 + $0x10] sm:$0xf]
      %v1725 = vld [vmem:[%s8 + $0x14] sm:$0xf]
      %v1726 = vld [vmem:[%s8 + $0x18] sm:$0xf]
      %v1727 = vld [vmem:[%s8 + $0x1c] sm:$0xf]
      %v1728 = vld [vmem:[%s8 + $0x20] sm:$0xf]
      %v1729 = vld [vmem:[%s8 + $0x24] sm:$0xf]
      %v1730 = vld [vmem:[%s8 + $0x28] sm:$0xf]
      %v1731 = vld [vmem:[%s8 + $0x2c] sm:$0xf]
      %v1732 = vld [vmem:[%s8 + $0x30] sm:$0xf]
      %v1733 = vld [vmem:[%s8 + $0x34] sm:$0xf]
      %v1734 = vld [vmem:[%s8 + $0x38] sm:$0xf]
      %v1735 = vld [vmem:[%s8 + $0x3c] sm:$0xf]
      %v1736 = vld [vmem:[%s8 + $0x40] sm:$0xf]
      %v1737 = vld [vmem:[%s8 + $0x44] sm:$0xf]
      %v1738 = vld [vmem:[%s8 + $0x48] sm:$0xf]
      %v1739 = vld [vmem:[%s8 + $0x4c] sm:$0xf]
      %v1740 = vld [vmem:[%s8 + $0x50] sm:$0xf]
      %v1741 = vld [vmem:[%s8 + $0x54] sm:$0xf]
      %v1742 = vld [vmem:[%s8 + $0x58] sm:$0xf]
      %v1743 = vld [vmem:[%s8 + $0x5c] sm:$0xf]
      %v1744 = vld [vmem:[%s8 + $0x60] sm:$0xf]
      %v1745 = vld [vmem:[%s8 + $0x64] sm:$0xf]
      %v1746 = vld [vmem:[%s8 + $0x68] sm:$0xf]
      %v1747 = vld [vmem:[%s8 + $0x6c] sm:$0xf]
      %v1748 = vld [vmem:[%s8 + $0x70] sm:$0xf]
      %v1749 = vld [vmem:[%s8 + $0x74] sm:$0xf]
      %v1750 = vld [vmem:[%s8 + $0x78] sm:$0xf]
      %v1751 = vld [vmem:[%s8 + $0x7c] sm:$0xf]
      %v1752 = vld [vmem:[%s9] sm:$0x1]
      %v1754 = vperm.slane %v1752, 0
      %v1788 = vunpack.c.l.b16 %v1720
      %v1789 = vunpack.c.l.b16 %v1721
      %v1790 = vunpack.c.l.b16 %v1722
      %v1791 = vunpack.c.l.b16 %v1723
      %v1792 = vunpack.c.l.b16 %v1724
      %v1793 = vunpack.c.l.b16 %v1725
      %v1794 = vunpack.c.l.b16 %v1726
      %v1795 = vunpack.c.l.b16 %v1727
      %v1796 = vunpack.c.l.b16 %v1728
      %v1797 = vunpack.c.l.b16 %v1729
      %v1798 = vunpack.c.l.b16 %v1730
      %v1799 = vunpack.c.l.b16 %v1731
      %v1800 = vunpack.c.l.b16 %v1732
      %v1801 = vunpack.c.l.b16 %v1733
      %v1802 = vunpack.c.l.b16 %v1734
      %v1803 = vunpack.c.l.b16 %v1735
      %v1804 = vunpack.c.l.b16 %v1736
      %v1805 = vunpack.c.l.b16 %v1737
      %v1806 = vunpack.c.l.b16 %v1738
      %v1807 = vunpack.c.l.b16 %v1739
      %v1808 = vunpack.c.l.b16 %v1740
      %v1809 = vunpack.c.l.b16 %v1741
      %v1810 = vunpack.c.l.b16 %v1742
      %v1811 = vunpack.c.l.b16 %v1743
      %v1812 = vunpack.c.l.b16 %v1744
      %v1813 = vunpack.c.l.b16 %v1745
      %v1814 = vunpack.c.l.b16 %v1746
      %v1815 = vunpack.c.l.b16 %v1747
      %v1816 = vunpack.c.l.b16 %v1748
      %v1817 = vunpack.c.l.b16 %v1749
      %v1818 = vunpack.c.l.b16 %v1750
      %v1819 = vunpack.c.l.b16 %v1751
      %v1820 = vpack.c.b16 %v1789, %v1788
      %v1821 = vpack.c.b16 %v1791, %v1790
      %v1822 = vpack.c.b16 %v1793, %v1792
      %v1823 = vpack.c.b16 %v1795, %v1794
      %v1824 = vpack.c.b16 %v1797, %v1796
      %v1825 = vpack.c.b16 %v1799, %v1798
      %v1826 = vpack.c.b16 %v1801, %v1800
      %v1827 = vpack.c.b16 %v1803, %v1802
      %v1828 = vpack.c.b16 %v1805, %v1804
      %v1829 = vpack.c.b16 %v1807, %v1806
      %v1830 = vpack.c.b16 %v1809, %v1808
      %v1831 = vpack.c.b16 %v1811, %v1810
      %v1832 = vpack.c.b16 %v1813, %v1812
      %v1833 = vpack.c.b16 %v1815, %v1814
      %v1834 = vpack.c.b16 %v1817, %v1816
      %v1835 = vpack.c.b16 %v1819, %v1818
      %1852 = vmatpush.bf16.msra.mxu0 %v1827
      %1853 = vmatpush.bf16.msra.mxu0 %v1826
      %1854 = vmatpush.bf16.msra.mxu0 %v1825
      %1855 = vmatpush.bf16.msra.mxu0 %v1824
      %1856 = vmatpush.bf16.msra.mxu0 %v1823
      %1857 = vmatpush.bf16.msra.mxu0 %v1822
      %1858 = vmatpush.bf16.msra.mxu0 %v1821
      %1859 = vmatpush.bf16.msra.mxu0 %v1820
      %1860 = vmatmul.bf16.gmra.mxu0 %v1718
      %v1861 = vpop.f32.mrf.mxu0
      %v1862 = vadd.f32 %v1754, %v1861
      %v1863 = vpop.f32.mrf.mxu0
      %1864 = vdwg.mxu0
      %1865 = vmatpush.bf16.msra.mxu0 %v1835
      %1866 = vmatpush.bf16.msra.mxu0 %v1834
      %1867 = vmatpush.bf16.msra.mxu0 %v1833
      %1868 = vmatpush.bf16.msra.mxu0 %v1832
      %1869 = vmatpush.bf16.msra.mxu0 %v1831
      %1870 = vmatpush.bf16.msra.mxu0 %v1830
      %1871 = vmatpush.bf16.msra.mxu0 %v1829
      %1872 = vmatpush.bf16.msra.mxu0 %v1828
      %1873 = vmatmul.bf16.gmra.mxu0 %v1719
      %v1874 = vpop.f32.mrf.mxu0
      %v1875 = vadd.f32 %v1862, %v1874
      %v1876 = vpop.f32.mrf.mxu0
      %1877 = vdwg.mxu0
      %v1878 = vmax.f32 %v1875, 0.0
      %v1879 = vpack.c.bf16 %v1878, %v1878
      %v1880 = vld [vmem:[%s10] sm:$0xf]
      %v1881 = vld [vmem:[%s10 + $0x4] sm:$0xf]
      %v1882 = vld [vmem:[%s10 + $0x8] sm:$0xf]
      %v1883 = vld [vmem:[%s10 + $0xc] sm:$0xf]
      %v1884 = vld [vmem:[%s10 + $0x10] sm:$0xf]
      %v1885 = vld [vmem:[%s10 + $0x14] sm:$0xf]
      %v1886 = vld [vmem:[%s10 + $0x18] sm:$0xf]
      %v1887 = vld [vmem:[%s10 + $0x1c] sm:$0xf]
      %v1888 = vld [vmem:[%s10 + $0x20] sm:$0xf]
      %v1889 = vld [vmem:[%s10 + $0x24] sm:$0xf]
      %v1890 = vld [vmem:[%s10 + $0x28] sm:$0xf]
      %v1891 = vld [vmem:[%s10 + $0x2c] sm:$0xf]
      %v1892 = vld [vmem:[%s10 + $0x30] sm:$0xf]
      %v1893 = vld [vmem:[%s10 + $0x34] sm:$0xf]
      %v1894 = vld [vmem:[%s10 + $0x38] sm:$0xf]
      %v1895 = vld [vmem:[%s10 + $0x3c] sm:$0xf]
      %v1896 = vld [vmem:[%s11] sm:$0x1]
      %v1898 = vperm.slane %v1896, 0
      %v1916 = vunpack.c.l.b16 %v1880
      %v1917 = vunpack.c.l.b16 %v1881
      %v1918 = vunpack.c.l.b16 %v1882
      %v1919 = vunpack.c.l.b16 %v1883
      %v1920 = vunpack.c.l.b16 %v1884
      %v1921 = vunpack.c.l.b16 %v1885
      %v1922 = vunpack.c.l.b16 %v1886
      %v1923 = vunpack.c.l.b16 %v1887
      %v1924 = vunpack.c.l.b16 %v1888
      %v1925 = vunpack.c.l.b16 %v1889
      %v1926 = vunpack.c.l.b16 %v1890
      %v1927 = vunpack.c.l.b16 %v1891
      %v1928 = vunpack.c.l.b16 %v1892
      %v1929 = vunpack.c.l.b16 %v1893
      %v1930 = vunpack.c.l.b16 %v1894
      %v1931 = vunpack.c.l.b16 %v1895
      %v1932 = vpack.c.b16 %v1917, %v1916
      %v1933 = vpack.c.b16 %v1919, %v1918
      %v1934 = vpack.c.b16 %v1921, %v1920
      %v1935 = vpack.c.b16 %v1923, %v1922
      %v1936 = vpack.c.b16 %v1925, %v1924
      %v1937 = vpack.c.b16 %v1927, %v1926
      %v1938 = vpack.c.b16 %v1929, %v1928
      %v1939 = vpack.c.b16 %v1931, %v1930
      %1948 = vmatpush.bf16.msra.mxu0 %v1939
      %1949 = vmatpush.bf16.msra.mxu0 %v1938
      %1950 = vmatpush.bf16.msra.mxu0 %v1937
      %1951 = vmatpush.bf16.msra.mxu0 %v1936
      %1952 = vmatpush.bf16.msra.mxu0 %v1935
      %1953 = vmatpush.bf16.msra.mxu0 %v1934
      %1954 = vmatpush.bf16.msra.mxu0 %v1933
      %1955 = vmatpush.bf16.msra.mxu0 %v1932
      %1956 = vmatmul.bf16.gmra.mxu0 %v1879
      %v1957 = vpop.f32.mrf.mxu0
      %v1958 = vadd.f32 %v1898, %v1957
      %v1959 = vpop.f32.mrf.mxu0
      %1960 = vdwg.mxu0
      %v1961 = vld [vmem:[%s12] sm:$0xff]
      %v1962 = vld [vmem:[%s12 + $0x8] sm:$0xff]
      %v1963 = vld [vmem:[%s12 + $0x10] sm:$0xff]
      %v1964 = vld [vmem:[%s12 + $0x18] sm:$0xff]
      %v1965 = vld [vmem:[%s12 + $0x20] sm:$0xff]
      %v1966 = vld [vmem:[%s12 + $0x28] sm:$0xff]
      %v1967 = vld [vmem:[%s12 + $0x30] sm:$0xff]
      %v1968 = vld [vmem:[%s12 + $0x38] sm:$0xff]
      %v1969 = vld [vmem:[%s12 + $0x40] sm:$0xff]
      %v1970 = vld [vmem:[%s12 + $0x48] sm:$0xff]
      %v1971 = vld [vmem:[%s12 + $0x50] sm:$0xff]
      %v1972 = vld [vmem:[%s12 + $0x58] sm:$0xff]
      %v1973 = vld [vmem:[%s12 + $0x60] sm:$0xff]
      %v1974 = vld [vmem:[%s12 + $0x68] sm:$0xff]
      %v1975 = vld [vmem:[%s12 + $0x70] sm:$0xff]
      %v1976 = vld [vmem:[%s12 + $0x78] sm:$0xff]
      %v1977 = vld [vmem:[%s12 + $0x80] sm:$0xff]
      %v1978 = vld [vmem:[%s12 + $0x88] sm:$0xff]
      %v1979 = vld [vmem:[%s12 + $0x90] sm:$0xff]
      %v1980 = vld [vmem:[%s12 + $0x98] sm:$0xff]
      %v1981 = vld [vmem:[%s12 + $0xa0] sm:$0xff]
      %v1982 = vld [vmem:[%s12 + $0xa8] sm:$0xff]
      %v1983 = vld [vmem:[%s12 + $0xb0] sm:$0xff]
      %v1984 = vld [vmem:[%s12 + $0xb8] sm:$0xff]
      %v1985 = vld [vmem:[%s12 + $0xc0] sm:$0xff]
      %v1986 = vld [vmem:[%s12 + $0xc8] sm:$0xff]
      %v1987 = vld [vmem:[%s12 + $0xd0] sm:$0xff]
      %v1988 = vld [vmem:[%s12 + $0xd8] sm:$0xff]
      %v1989 = vld [vmem:[%s12 + $0xe0] sm:$0xff]
      %v1990 = vld [vmem:[%s12 + $0xe8] sm:$0xff]
      %v1991 = vld [vmem:[%s12 + $0xf0] sm:$0xff]
      %v1992 = vld [vmem:[%s12 + $0xf8] sm:$0xff]
      %v1993 = vld [vmem:[%s13] sm:$0x3]
      %v1995 = vperm.slane %v1993, 0
      %v1996 = vperm.slane %v1993, 1
      %v2031 = vunpack.c.l.b16 %v1961
      %v2032 = vunpack.c.h.b16 %v1961
      %v2033 = vunpack.c.l.b16 %v1962
      %v2034 = vunpack.c.h.b16 %v1962
      %v2035 = vunpack.c.l.b16 %v1963
      %v2036 = vunpack.c.h.b16 %v1963
      %v2037 = vunpack.c.l.b16 %v1964
      %v2038 = vunpack.c.h.b16 %v1964
      %v2039 = vunpack.c.l.b16 %v1965
      %v2040 = vunpack.c.h.b16 %v1965
      %v2041 = vunpack.c.l.b16 %v1966
      %v2042 = vunpack.c.h.b16 %v1966
      %v2043 = vunpack.c.l.b16 %v1967
      %v2044 = vunpack.c.h.b16 %v1967
      %v2045 = vunpack.c.l.b16 %v1968
      %v2046 = vunpack.c.h.b16 %v1968
      %v2047 = vunpack.c.l.b16 %v1969
      %v2048 = vunpack.c.h.b16 %v1969
      %v2049 = vunpack.c.l.b16 %v1970
      %v2050 = vunpack.c.h.b16 %v1970
      %v2051 = vunpack.c.l.b16 %v1971
      %v2052 = vunpack.c.h.b16 %v1971
      %v2053 = vunpack.c.l.b16 %v1972
      %v2054 = vunpack.c.h.b16 %v1972
      %v2055 = vunpack.c.l.b16 %v1973
      %v2056 = vunpack.c.h.b16 %v1973
      %v2057 = vunpack.c.l.b16 %v1974
      %v2058 = vunpack.c.h.b16 %v1974
      %v2059 = vunpack.c.l.b16 %v1975
      %v2060 = vunpack.c.h.b16 %v1975
      %v2061 = vunpack.c.l.b16 %v1976
      %v2062 = vunpack.c.h.b16 %v1976
      %v2063 = vunpack.c.l.b16 %v1977
      %v2064 = vunpack.c.h.b16 %v1977
      %v2065 = vunpack.c.l.b16 %v1978
      %v2066 = vunpack.c.h.b16 %v1978
      %v2067 = vunpack.c.l.b16 %v1979
      %v2068 = vunpack.c.h.b16 %v1979
      %v2069 = vunpack.c.l.b16 %v1980
      %v2070 = vunpack.c.h.b16 %v1980
      %v2071 = vunpack.c.l.b16 %v1981
      %v2072 = vunpack.c.h.b16 %v1981
      %v2073 = vunpack.c.l.b16 %v1982
      %v2074 = vunpack.c.h.b16 %v1982
      %v2075 = vunpack.c.l.b16 %v1983
      %v2076 = vunpack.c.h.b16 %v1983
      %v2077 = vunpack.c.l.b16 %v1984
      %v2078 = vunpack.c.h.b16 %v1984
      %v2079 = vunpack.c.l.b16 %v1985
      %v2080 = vunpack.c.h.b16 %v1985
      %v2081 = vunpack.c.l.b16 %v1986
      %v2082 = vunpack.c.h.b16 %v1986
      %v2083 = vunpack.c.l.b16 %v1987
      %v2084 = vunpack.c.h.b16 %v1987
      %v2085 = vunpack.c.l.b16 %v1988
      %v2086 = vunpack.c.h.b16 %v1988
      %v2087 = vunpack.c.l.b16 %v1989
      %v2088 = vunpack.c.h.b16 %v1989
      %v2089 = vunpack.c.l.b16 %v1990
      %v2090 = vunpack.c.h.b16 %v1990
      %v2091 = vunpack.c.l.b16 %v1991
      %v2092 = vunpack.c.h.b16 %v1991
      %v2093 = vunpack.c.l.b16 %v1992
      %v2094 = vunpack.c.h.b16 %v1992
      %v2095 = vpack.c.b16 %v2033, %v2031
      %v2096 = vpack.c.b16 %v2034, %v2032
      %v2097 = vpack.c.b16 %v2037, %v2035
      %v2098 = vpack.c.b16 %v2038, %v2036
      %v2099 = vpack.c.b16 %v2041, %v2039
      %v2100 = vpack.c.b16 %v2042, %v2040
      %v2101 = vpack.c.b16 %v2045, %v2043
      %v2102 = vpack.c.b16 %v2046, %v2044
      %v2103 = vpack.c.b16 %v2049, %v2047
      %v2104 = vpack.c.b16 %v2050, %v2048
      %v2105 = vpack.c.b16 %v2053, %v2051
      %v2106 = vpack.c.b16 %v2054, %v2052
      %v2107 = vpack.c.b16 %v2057, %v2055
      %v2108 = vpack.c.b16 %v2058, %v2056
      %v2109 = vpack.c.b16 %v2061, %v2059
      %v2110 = vpack.c.b16 %v2062, %v2060
      %v2111 = vpack.c.b16 %v2065, %v2063
      %v2112 = vpack.c.b16 %v2066, %v2064
      %v2113 = vpack.c.b16 %v2069, %v2067
      %v2114 = vpack.c.b16 %v2070, %v2068
      %v2115 = vpack.c.b16 %v2073, %v2071
      %v2116 = vpack.c.b16 %v2074, %v2072
      %v2117 = vpack.c.b16 %v2077, %v2075
      %v2118 = vpack.c.b16 %v2078, %v2076
      %v2119 = vpack.c.b16 %v2081, %v2079
      %v2120 = vpack.c.b16 %v2082, %v2080
      %v2121 = vpack.c.b16 %v2085, %v2083
      %v2122 = vpack.c.b16 %v2086, %v2084
      %v2123 = vpack.c.b16 %v2089, %v2087
      %v2124 = vpack.c.b16 %v2090, %v2088
      %v2125 = vpack.c.b16 %v2093, %v2091
      %v2126 = vpack.c.b16 %v2094, %v2092
      %2159 = vmatpush.bf16.msra.mxu0 %v2109
      %2160 = vmatpush.bf16.msra.mxu0 %v2107
      %2161 = vmatpush.bf16.msra.mxu0 %v2105
      %2162 = vmatpush.bf16.msra.mxu0 %v2103
      %2163 = vmatpush.bf16.msra.mxu0 %v2101
      %2164 = vmatpush.bf16.msra.mxu0 %v2099
      %2165 = vmatpush.bf16.msra.mxu0 %v2097
      %2166 = vmatpush.bf16.msra.mxu0 %v2095
      %2167 = vmatmul.bf16.gmra.mxu0 %v1464
      %v2168 = vpop.f32.mrf.mxu0
      %v2169 = vadd.f32 %v1995, %v2168
      %v2170 = vpop.f32.mrf.mxu0
      %2171 = vdwg.mxu0
      %2172 = vmatpush.bf16.msra.mxu0 %v2125
      %2173 = vmatpush.bf16.msra.mxu0 %v2123
      %2174 = vmatpush.bf16.msra.mxu0 %v2121
      %2175 = vmatpush.bf16.msra.mxu0 %v2119
      %2176 = vmatpush.bf16.msra.mxu0 %v2117
      %2177 = vmatpush.bf16.msra.mxu0 %v2115
      %2178 = vmatpush.bf16.msra.mxu0 %v2113
      %2179 = vmatpush.bf16.msra.mxu0 %v2111
      %2180 = vmatmul.bf16.gmra.mxu0 %v1465
      %v2181 = vpop.f32.mrf.mxu0
      %v2182 = vadd.f32 %v2169, %v2181
      %v2183 = vpop.f32.mrf.mxu0
      %2184 = vdwg.mxu0
      %2185 = vmatpush.bf16.msra.mxu0 %v2110
      %2186 = vmatpush.bf16.msra.mxu0 %v2108
      %2187 = vmatpush.bf16.msra.mxu0 %v2106
      %2188 = vmatpush.bf16.msra.mxu0 %v2104
      %2189 = vmatpush.bf16.msra.mxu0 %v2102
      %2190 = vmatpush.bf16.msra.mxu0 %v2100
      %2191 = vmatpush.bf16.msra.mxu0 %v2098
      %2192 = vmatpush.bf16.msra.mxu0 %v2096
      %2193 = vmatmul.bf16.gmra.mxu0 %v1464
      %v2194 = vpop.f32.mrf.mxu0
      %v2195 = vadd.f32 %v1996, %v2194
      %v2196 = vpop.f32.mrf.mxu0
      %2197 = vdwg.mxu0
      %2198 = vmatpush.bf16.msra.mxu0 %v2126
      %2199 = vmatpush.bf16.msra.mxu0 %v2124
      %2200 = vmatpush.bf16.msra.mxu0 %v2122
      %2201 = vmatpush.bf16.msra.mxu0 %v2120
      %2202 = vmatpush.bf16.msra.mxu0 %v2118
      %2203 = vmatpush.bf16.msra.mxu0 %v2116
      %2204 = vmatpush.bf16.msra.mxu0 %v2114
      %2205 = vmatpush.bf16.msra.mxu0 %v2112
      %2206 = vmatmul.bf16.gmra.mxu0 %v1465
      %v2207 = vpop.f32.mrf.mxu0
      %v2208 = vadd.f32 %v2195, %v2207
      %v2209 = vpop.f32.mrf.mxu0
      %2210 = vdwg.mxu0
      %v2211 = vmax.f32 %v2182, 0.0
      %v2212 = vmax.f32 %v2208, 0.0
      %v2213 = vpack.c.bf16 %v2211, %v2211
      %v2214 = vpack.c.bf16 %v2212, %v2212
      %v2215 = vld [vmem:[%s14] sm:$0xf]
      %v2216 = vld [vmem:[%s14 + $0x4] sm:$0xf]
      %v2217 = vld [vmem:[%s14 + $0x8] sm:$0xf]
      %v2218 = vld [vmem:[%s14 + $0xc] sm:$0xf]
      %v2219 = vld [vmem:[%s14 + $0x10] sm:$0xf]
      %v2220 = vld [vmem:[%s14 + $0x14] sm:$0xf]
      %v2221 = vld [vmem:[%s14 + $0x18] sm:$0xf]
      %v2222 = vld [vmem:[%s14 + $0x1c] sm:$0xf]
      %v2223 = vld [vmem:[%s14 + $0x20] sm:$0xf]
      %v2224 = vld [vmem:[%s14 + $0x24] sm:$0xf]
      %v2225 = vld [vmem:[%s14 + $0x28] sm:$0xf]
      %v2226 = vld [vmem:[%s14 + $0x2c] sm:$0xf]
      %v2227 = vld [vmem:[%s14 + $0x30] sm:$0xf]
      %v2228 = vld [vmem:[%s14 + $0x34] sm:$0xf]
      %v2229 = vld [vmem:[%s14 + $0x38] sm:$0xf]
      %v2230 = vld [vmem:[%s14 + $0x3c] sm:$0xf]
      %v2231 = vld [vmem:[%s14 + $0x40] sm:$0xf]
      %v2232 = vld [vmem:[%s14 + $0x44] sm:$0xf]
      %v2233 = vld [vmem:[%s14 + $0x48] sm:$0xf]
      %v2234 = vld [vmem:[%s14 + $0x4c] sm:$0xf]
      %v2235 = vld [vmem:[%s14 + $0x50] sm:$0xf]
      %v2236 = vld [vmem:[%s14 + $0x54] sm:$0xf]
      %v2237 = vld [vmem:[%s14 + $0x58] sm:$0xf]
      %v2238 = vld [vmem:[%s14 + $0x5c] sm:$0xf]
      %v2239 = vld [vmem:[%s14 + $0x60] sm:$0xf]
      %v2240 = vld [vmem:[%s14 + $0x64] sm:$0xf]
      %v2241 = vld [vmem:[%s14 + $0x68] sm:$0xf]
      %v2242 = vld [vmem:[%s14 + $0x6c] sm:$0xf]
      %v2243 = vld [vmem:[%s14 + $0x70] sm:$0xf]
      %v2244 = vld [vmem:[%s14 + $0x74] sm:$0xf]
      %v2245 = vld [vmem:[%s14 + $0x78] sm:$0xf]
      %v2246 = vld [vmem:[%s14 + $0x7c] sm:$0xf]
      %v2247 = vld [vmem:[%s15] sm:$0x1]
      %v2249 = vperm.slane %v2247, 0
      %v2283 = vunpack.c.l.b16 %v2215
      %v2284 = vunpack.c.l.b16 %v2216
      %v2285 = vunpack.c.l.b16 %v2217
      %v2286 = vunpack.c.l.b16 %v2218
      %v2287 = vunpack.c.l.b16 %v2219
      %v2288 = vunpack.c.l.b16 %v2220
      %v2289 = vunpack.c.l.b16 %v2221
      %v2290 = vunpack.c.l.b16 %v2222
      %v2291 = vunpack.c.l.b16 %v2223
      %v2292 = vunpack.c.l.b16 %v2224
      %v2293 = vunpack.c.l.b16 %v2225
      %v2294 = vunpack.c.l.b16 %v2226
      %v2295 = vunpack.c.l.b16 %v2227
      %v2296 = vunpack.c.l.b16 %v2228
      %v2297 = vunpack.c.l.b16 %v2229
      %v2298 = vunpack.c.l.b16 %v2230
      %v2299 = vunpack.c.l.b16 %v2231
      %v2300 = vunpack.c.l.b16 %v2232
      %v2301 = vunpack.c.l.b16 %v2233
      %v2302 = vunpack.c.l.b16 %v2234
      %v2303 = vunpack.c.l.b16 %v2235
      %v2304 = vunpack.c.l.b16 %v2236
      %v2305 = vunpack.c.l.b16 %v2237
      %v2306 = vunpack.c.l.b16 %v2238
      %v2307 = vunpack.c.l.b16 %v2239
      %v2308 = vunpack.c.l.b16 %v2240
      %v2309 = vunpack.c.l.b16 %v2241
      %v2310 = vunpack.c.l.b16 %v2242
      %v2311 = vunpack.c.l.b16 %v2243
      %v2312 = vunpack.c.l.b16 %v2244
      %v2313 = vunpack.c.l.b16 %v2245
      %v2314 = vunpack.c.l.b16 %v2246
      %v2315 = vpack.c.b16 %v2284, %v2283
      %v2316 = vpack.c.b16 %v2286, %v2285
      %v2317 = vpack.c.b16 %v2288, %v2287
      %v2318 = vpack.c.b16 %v2290, %v2289
      %v2319 = vpack.c.b16 %v2292, %v2291
      %v2320 = vpack.c.b16 %v2294, %v2293
      %v2321 = vpack.c.b16 %v2296, %v2295
      %v2322 = vpack.c.b16 %v2298, %v2297
      %v2323 = vpack.c.b16 %v2300, %v2299
      %v2324 = vpack.c.b16 %v2302, %v2301
      %v2325 = vpack.c.b16 %v2304, %v2303
      %v2326 = vpack.c.b16 %v2306, %v2305
      %v2327 = vpack.c.b16 %v2308, %v2307
      %v2328 = vpack.c.b16 %v2310, %v2309
      %v2329 = vpack.c.b16 %v2312, %v2311
      %v2330 = vpack.c.b16 %v2314, %v2313
      %2347 = vmatpush.bf16.msra.mxu0 %v2322
      %2348 = vmatpush.bf16.msra.mxu0 %v2321
      %2349 = vmatpush.bf16.msra.mxu0 %v2320
      %2350 = vmatpush.bf16.msra.mxu0 %v2319
      %2351 = vmatpush.bf16.msra.mxu0 %v2318
      %2352 = vmatpush.bf16.msra.mxu0 %v2317
      %2353 = vmatpush.bf16.msra.mxu0 %v2316
      %2354 = vmatpush.bf16.msra.mxu0 %v2315
      %2355 = vmatmul.bf16.gmra.mxu0 %v2213
      %v2356 = vpop.f32.mrf.mxu0
      %v2357 = vadd.f32 %v2249, %v2356
      %v2358 = vpop.f32.mrf.mxu0
      %2359 = vdwg.mxu0
      %2360 = vmatpush.bf16.msra.mxu0 %v2330
      %2361 = vmatpush.bf16.msra.mxu0 %v2329
      %2362 = vmatpush.bf16.msra.mxu0 %v2328
      %2363 = vmatpush.bf16.msra.mxu0 %v2327
      %2364 = vmatpush.bf16.msra.mxu0 %v2326
      %2365 = vmatpush.bf16.msra.mxu0 %v2325
      %2366 = vmatpush.bf16.msra.mxu0 %v2324
      %2367 = vmatpush.bf16.msra.mxu0 %v2323
      %2368 = vmatmul.bf16.gmra.mxu0 %v2214
      %v2369 = vpop.f32.mrf.mxu0
      %v2370 = vadd.f32 %v2357, %v2369
      %v2371 = vpop.f32.mrf.mxu0
      %2372 = vdwg.mxu0
      %v2373 = vmax.f32 %v2370, 0.0
      %v2374 = vpack.c.bf16 %v2373, %v2373
      %v2375 = vld [vmem:[%s16] sm:$0xf]
      %v2376 = vld [vmem:[%s16 + $0x4] sm:$0xf]
      %v2377 = vld [vmem:[%s16 + $0x8] sm:$0xf]
      %v2378 = vld [vmem:[%s16 + $0xc] sm:$0xf]
      %v2379 = vld [vmem:[%s16 + $0x10] sm:$0xf]
      %v2380 = vld [vmem:[%s16 + $0x14] sm:$0xf]
      %v2381 = vld [vmem:[%s16 + $0x18] sm:$0xf]
      %v2382 = vld [vmem:[%s16 + $0x1c] sm:$0xf]
      %v2383 = vld [vmem:[%s16 + $0x20] sm:$0xf]
      %v2384 = vld [vmem:[%s16 + $0x24] sm:$0xf]
      %v2385 = vld [vmem:[%s16 + $0x28] sm:$0xf]
      %v2386 = vld [vmem:[%s16 + $0x2c] sm:$0xf]
      %v2387 = vld [vmem:[%s16 + $0x30] sm:$0xf]
      %v2388 = vld [vmem:[%s16 + $0x34] sm:$0xf]
      %v2389 = vld [vmem:[%s16 + $0x38] sm:$0xf]
      %v2390 = vld [vmem:[%s16 + $0x3c] sm:$0xf]
      %v2391 = vld [vmem:[%s17] sm:$0x1]
      %v2393 = vperm.slane %v2391, 0
      %v2411 = vunpack.c.l.b16 %v2375
      %v2412 = vunpack.c.l.b16 %v2376
      %v2413 = vunpack.c.l.b16 %v2377
      %v2414 = vunpack.c.l.b16 %v2378
      %v2415 = vunpack.c.l.b16 %v2379
      %v2416 = vunpack.c.l.b16 %v2380
      %v2417 = vunpack.c.l.b16 %v2381
      %v2418 = vunpack.c.l.b16 %v2382
      %v2419 = vunpack.c.l.b16 %v2383
      %v2420 = vunpack.c.l.b16 %v2384
      %v2421 = vunpack.c.l.b16 %v2385
      %v2422 = vunpack.c.l.b16 %v2386
      %v2423 = vunpack.c.l.b16 %v2387
      %v2424 = vunpack.c.l.b16 %v2388
      %v2425 = vunpack.c.l.b16 %v2389
      %v2426 = vunpack.c.l.b16 %v2390
      %v2427 = vpack.c.b16 %v2412, %v2411
      %v2428 = vpack.c.b16 %v2414, %v2413
      %v2429 = vpack.c.b16 %v2416, %v2415
      %v2430 = vpack.c.b16 %v2418, %v2417
      %v2431 = vpack.c.b16 %v2420, %v2419
      %v2432 = vpack.c.b16 %v2422, %v2421
      %v2433 = vpack.c.b16 %v2424, %v2423
      %v2434 = vpack.c.b16 %v2426, %v2425
      %2443 = vmatpush.bf16.msra.mxu0 %v2434
      %2444 = vmatpush.bf16.msra.mxu0 %v2433
      %2445 = vmatpush.bf16.msra.mxu0 %v2432
      %2446 = vmatpush.bf16.msra.mxu0 %v2431
      %2447 = vmatpush.bf16.msra.mxu0 %v2430
      %2448 = vmatpush.bf16.msra.mxu0 %v2429
      %2449 = vmatpush.bf16.msra.mxu0 %v2428
      %2450 = vmatpush.bf16.msra.mxu0 %v2427
      %2451 = vmatmul.bf16.gmra.mxu0 %v2374
      %v2452 = vpop.f32.mrf.mxu0
      %v2453 = vadd.f32 %v2393, %v2452
      %v2454 = vpop.f32.mrf.mxu0
      %2455 = vdwg.mxu0
      %v2456 = vpack.c.bf16 %v2453, %v2453
      %v2457 = vld [vmem:[%s18] sm:$0xf]
      %v2458 = vld [vmem:[%s18 + $0x4] sm:$0xf]
      %v2459 = vld [vmem:[%s18 + $0x8] sm:$0xf]
      %v2460 = vld [vmem:[%s18 + $0xc] sm:$0xf]
      %v2461 = vld [vmem:[%s18 + $0x10] sm:$0xf]
      %v2462 = vld [vmem:[%s18 + $0x14] sm:$0xf]
      %v2463 = vld [vmem:[%s18 + $0x18] sm:$0xf]
      %v2464 = vld [vmem:[%s18 + $0x1c] sm:$0xf]
      %v2465 = vld [vmem:[%s18 + $0x20] sm:$0xf]
      %v2466 = vld [vmem:[%s18 + $0x24] sm:$0xf]
      %v2467 = vld [vmem:[%s18 + $0x28] sm:$0xf]
      %v2468 = vld [vmem:[%s18 + $0x2c] sm:$0xf]
      %v2469 = vld [vmem:[%s18 + $0x30] sm:$0xf]
      %v2470 = vld [vmem:[%s18 + $0x34] sm:$0xf]
      %v2471 = vld [vmem:[%s18 + $0x38] sm:$0xf]
      %v2472 = vld [vmem:[%s18 + $0x3c] sm:$0xf]
      %v2473 = vld [vmem:[%s19] sm:$0x1]
      %v2475 = vperm.slane %v2473, 0
      %v2493 = vunpack.c.l.b16 %v2457
      %v2494 = vunpack.c.l.b16 %v2458
      %v2495 = vunpack.c.l.b16 %v2459
      %v2496 = vunpack.c.l.b16 %v2460
      %v2497 = vunpack.c.l.b16 %v2461
      %v2498 = vunpack.c.l.b16 %v2462
      %v2499 = vunpack.c.l.b16 %v2463
      %v2500 = vunpack.c.l.b16 %v2464
      %v2501 = vunpack.c.l.b16 %v2465
      %v2502 = vunpack.c.l.b16 %v2466
      %v2503 = vunpack.c.l.b16 %v2467
      %v2504 = vunpack.c.l.b16 %v2468
      %v2505 = vunpack.c.l.b16 %v2469
      %v2506 = vunpack.c.l.b16 %v2470
      %v2507 = vunpack.c.l.b16 %v2471
      %v2508 = vunpack.c.l.b16 %v2472
      %v2509 = vpack.c.b16 %v2494, %v2493
      %v2510 = vpack.c.b16 %v2496, %v2495
      %v2511 = vpack.c.b16 %v2498, %v2497
      %v2512 = vpack.c.b16 %v2500, %v2499
      %v2513 = vpack.c.b16 %v2502, %v2501
      %v2514 = vpack.c.b16 %v2504, %v2503
      %v2515 = vpack.c.b16 %v2506, %v2505
      %v2516 = vpack.c.b16 %v2508, %v2507
      %2525 = vmatpush.bf16.msra.mxu0 %v2516
      %2526 = vmatpush.bf16.msra.mxu0 %v2515
      %2527 = vmatpush.bf16.msra.mxu0 %v2514
      %2528 = vmatpush.bf16.msra.mxu0 %v2513
      %2529 = vmatpush.bf16.msra.mxu0 %v2512
      %2530 = vmatpush.bf16.msra.mxu0 %v2511
      %2531 = vmatpush.bf16.msra.mxu0 %v2510
      %2532 = vmatpush.bf16.msra.mxu0 %v2509
      %2533 = vmatmul.bf16.gmra.mxu0 %v2456
      %v2534 = vpop.f32.mrf.mxu0
      %v2535 = vadd.f32 %v2475, %v2534
      %v2536 = vpop.f32.mrf.mxu0
      %2537 = vdwg.mxu0
      %v2538 = vpack.c.bf16 %v2535, %v2535
      %v2539 = vpack.c.bf16 %v1958, %v1958
      %2540 = vmatpush.bf16.xpose.msra.mxu0 0
      %2541 = vmatpush.bf16.xpose.msra.mxu0 0
      %2542 = vmatpush.bf16.xpose.msra.mxu0 0
      %2543 = vmatpush.bf16.xpose.msra.mxu0 0
      %2544 = vmatpush.bf16.xpose.msra.mxu0 0
      %2545 = vmatpush.bf16.xpose.msra.mxu0 0
      %2546 = vmatpush.bf16.xpose.msra.mxu0 0
      %2547 = vmatpush.bf16.xpose.msra.mxu0 %v2539
      %2548 = vmatmul.bf16.gmra.mxu0 %v2538
      %v2549 = vpop.f32.mrf.mxu0
      %v2550 = vadd.f32 0.0, %v2549
      %v2551 = vpop.f32.mrf.mxu0
      %2552 = vdwg.mxu0
      %vm2553 = vcmask 36864
      %v2554 = vsel %vm2553, %v2550, -inf
      %2555 = vmax.xlane.f32.xlu0 %v2554
      %v2556 = vpop.xlane.xlu0 %2555
      %v2557 = vsub.f32 %v2550, %v2556
      %v2558 = vmul.f32 %v2557, 1.442695
      %v2559 = vpow.pop %v2558
      %v2560 = vsel %vm2553, %v2559, 0.0
      %2561 = vadd.xlane.f32.xlu0 %v2560
      %v2562 = vpop.xlane.xlu0 %2561
      %v2563 = vrcp.pop %v2562
      %v2564 = vmul.f32 %v2559, %v2563
      %2565 = vst.msk [vmem:[%s733] sm:$0x1f] %vm2553, %v2564
      %v2567 = vrot.slane %v2564, 1
      %v2568 = vrot.slane %v2564, 2
      %v2569 = vrot.slane %v2564, 3
      %v2570 = vrot.slane %v2564, 4
      %v2571 = vperm.slane %v2564, 0
      %v2572 = vperm.slane %v2567, 0
      %v2573 = vperm.slane %v2568, 0
      %v2574 = vperm.slane %v2569, 0
      %v2575 = vperm.slane %v2570, 0
      %2576 = vset.pattern.permute.xlu0 0
      %2577 = vperm.xlu0 %2576, %v2571
      %v2578 = vpop.permute.xlu0 %2577
      %2580 = vset.pattern.permute.xlu0 0
      %2581 = vperm.xlu0 %2580, %v2572
      %v2582 = vpop.permute.xlu0 %2581
      %2584 = vset.pattern.permute.xlu0 0
      %2585 = vperm.xlu0 %2584, %v2573
      %v2586 = vpop.permute.xlu0 %2585
      %2588 = vset.pattern.permute.xlu0 0
      %2589 = vperm.xlu0 %2588, %v2574
      %v2590 = vpop.permute.xlu0 %2589
      %2592 = vset.pattern.permute.xlu0 0
      %2593 = vperm.xlu0 %2592, %v2575
      %v2594 = vpop.permute.xlu0 %2593
      %v2596 = vmul.f32 %v2578, %v1390
      %v2597 = vmul.f32 %v2578, %v1392
      %v2598 = vmul.f32 %v2582, %v1390
      %v2599 = vmul.f32 %v2582, %v1392
      %v2600 = vmul.f32 %v2586, %v1390
      %v2601 = vmul.f32 %v2586, %v1392
      %v2602 = vmul.f32 %v2590, %v1390
      %v2603 = vmul.f32 %v2590, %v1392
      %v2604 = vmul.f32 %v2594, %v1390
      %v2605 = vmul.f32 %v2594, %v1392
      %v2606 = vadd.f32 %v2596, 0.0
      %v2607 = vadd.f32 %v2597, 0.0
      %v2608 = vadd.f32 %v2598, 0.0
      %v2609 = vadd.f32 %v2599, 0.0
      %v2610 = vadd.f32 %v2600, 0.0
      %v2611 = vadd.f32 %v2601, 0.0
      %v2612 = vadd.f32 %v2602, 0.0
      %v2613 = vadd.f32 %v2603, 0.0
      %v2614 = vadd.f32 %v2604, 0.0
      %v2615 = vadd.f32 %v2605, 0.0
      %2616 = vset.pattern.permute.xlu0 1
      %2617 = vperm.xlu0 %2616, %v2571
      %v2618 = vpop.permute.xlu0 %2617
      %2620 = vset.pattern.permute.xlu0 1
      %2621 = vperm.xlu0 %2620, %v2572
      %v2622 = vpop.permute.xlu0 %2621
      %2624 = vset.pattern.permute.xlu0 1
      %2625 = vperm.xlu0 %2624, %v2573
      %v2626 = vpop.permute.xlu0 %2625
      %2628 = vset.pattern.permute.xlu0 1
      %2629 = vperm.xlu0 %2628, %v2574
      %v2630 = vpop.permute.xlu0 %2629
      %2632 = vset.pattern.permute.xlu0 1
      %2633 = vperm.xlu0 %2632, %v2575
      %v2634 = vpop.permute.xlu0 %2633
      %v2636 = vmul.f32 %v2618, %v1395
      %v2637 = vmul.f32 %v2618, %v1397
      %v2638 = vmul.f32 %v2622, %v1395
      %v2639 = vmul.f32 %v2622, %v1397
      %v2640 = vmul.f32 %v2626, %v1395
      %v2641 = vmul.f32 %v2626, %v1397
      %v2642 = vmul.f32 %v2630, %v1395
      %v2643 = vmul.f32 %v2630, %v1397
      %v2644 = vmul.f32 %v2634, %v1395
      %v2645 = vmul.f32 %v2634, %v1397
      %v2646 = vadd.f32 %v2606, %v2636
      %v2647 = vadd.f32 %v2607, %v2637
      %v2648 = vadd.f32 %v2608, %v2638
      %v2649 = vadd.f32 %v2609, %v2639
      %v2650 = vadd.f32 %v2610, %v2640
      %v2651 = vadd.f32 %v2611, %v2641
      %v2652 = vadd.f32 %v2612, %v2642
      %v2653 = vadd.f32 %v2613, %v2643
      %v2654 = vadd.f32 %v2614, %v2644
      %v2655 = vadd.f32 %v2615, %v2645
      %2656 = vset.pattern.permute.xlu0 2
      %2657 = vperm.xlu0 %2656, %v2571
      %v2658 = vpop.permute.xlu0 %2657
      %2660 = vset.pattern.permute.xlu0 2
      %2661 = vperm.xlu0 %2660, %v2572
      %v2662 = vpop.permute.xlu0 %2661
      %2664 = vset.pattern.permute.xlu0 2
      %2665 = vperm.xlu0 %2664, %v2573
      %v2666 = vpop.permute.xlu0 %2665
      %2668 = vset.pattern.permute.xlu0 2
      %2669 = vperm.xlu0 %2668, %v2574
      %v2670 = vpop.permute.xlu0 %2669
      %2672 = vset.pattern.permute.xlu0 2
      %2673 = vperm.xlu0 %2672, %v2575
      %v2674 = vpop.permute.xlu0 %2673
      %v2676 = vmul.f32 %v2658, %v1400
      %v2677 = vmul.f32 %v2658, %v1402
      %v2678 = vmul.f32 %v2662, %v1400
      %v2679 = vmul.f32 %v2662, %v1402
      %v2680 = vmul.f32 %v2666, %v1400
      %v2681 = vmul.f32 %v2666, %v1402
      %v2682 = vmul.f32 %v2670, %v1400
      %v2683 = vmul.f32 %v2670, %v1402
      %v2684 = vmul.f32 %v2674, %v1400
      %v2685 = vmul.f32 %v2674, %v1402
      %v2686 = vadd.f32 %v2646, %v2676
      %v2687 = vadd.f32 %v2647, %v2677
      %v2688 = vadd.f32 %v2648, %v2678
      %v2689 = vadd.f32 %v2649, %v2679
      %v2690 = vadd.f32 %v2650, %v2680
      %v2691 = vadd.f32 %v2651, %v2681
      %v2692 = vadd.f32 %v2652, %v2682
      %v2693 = vadd.f32 %v2653, %v2683
      %v2694 = vadd.f32 %v2654, %v2684
      %v2695 = vadd.f32 %v2655, %v2685
      %2696 = vset.pattern.permute.xlu0 3
      %2697 = vperm.xlu0 %2696, %v2571
      %v2698 = vpop.permute.xlu0 %2697
      %2700 = vset.pattern.permute.xlu0 3
      %2701 = vperm.xlu0 %2700, %v2572
      %v2702 = vpop.permute.xlu0 %2701
      %2704 = vset.pattern.permute.xlu0 3
      %2705 = vperm.xlu0 %2704, %v2573
      %v2706 = vpop.permute.xlu0 %2705
      %2708 = vset.pattern.permute.xlu0 3
      %2709 = vperm.xlu0 %2708, %v2574
      %v2710 = vpop.permute.xlu0 %2709
      %2712 = vset.pattern.permute.xlu0 3
      %2713 = vperm.xlu0 %2712, %v2575
      %v2714 = vpop.permute.xlu0 %2713
      %v2716 = vmul.f32 %v2698, %v1405
      %v2717 = vmul.f32 %v2698, %v1407
      %v2718 = vmul.f32 %v2702, %v1405
      %v2719 = vmul.f32 %v2702, %v1407
      %v2720 = vmul.f32 %v2706, %v1405
      %v2721 = vmul.f32 %v2706, %v1407
      %v2722 = vmul.f32 %v2710, %v1405
      %v2723 = vmul.f32 %v2710, %v1407
      %v2724 = vmul.f32 %v2714, %v1405
      %v2725 = vmul.f32 %v2714, %v1407
      %v2726 = vadd.f32 %v2686, %v2716
      %v2727 = vadd.f32 %v2687, %v2717
      %v2728 = vadd.f32 %v2688, %v2718
      %v2729 = vadd.f32 %v2689, %v2719
      %v2730 = vadd.f32 %v2690, %v2720
      %v2731 = vadd.f32 %v2691, %v2721
      %v2732 = vadd.f32 %v2692, %v2722
      %v2733 = vadd.f32 %v2693, %v2723
      %v2734 = vadd.f32 %v2694, %v2724
      %v2735 = vadd.f32 %v2695, %v2725
      %2736 = vset.pattern.permute.xlu0 4
      %2737 = vperm.xlu0 %2736, %v2571
      %v2738 = vpop.permute.xlu0 %2737
      %2740 = vset.pattern.permute.xlu0 4
      %2741 = vperm.xlu0 %2740, %v2572
      %v2742 = vpop.permute.xlu0 %2741
      %2744 = vset.pattern.permute.xlu0 4
      %2745 = vperm.xlu0 %2744, %v2573
      %v2746 = vpop.permute.xlu0 %2745
      %2748 = vset.pattern.permute.xlu0 4
      %2749 = vperm.xlu0 %2748, %v2574
      %v2750 = vpop.permute.xlu0 %2749
      %2752 = vset.pattern.permute.xlu0 4
      %2753 = vperm.xlu0 %2752, %v2575
      %v2754 = vpop.permute.xlu0 %2753
      %v2756 = vmul.f32 %v2738, %v1410
      %v2757 = vmul.f32 %v2738, %v1412
      %v2758 = vmul.f32 %v2742, %v1410
      %v2759 = vmul.f32 %v2742, %v1412
      %v2760 = vmul.f32 %v2746, %v1410
      %v2761 = vmul.f32 %v2746, %v1412
      %v2762 = vmul.f32 %v2750, %v1410
      %v2763 = vmul.f32 %v2750, %v1412
      %v2764 = vmul.f32 %v2754, %v1410
      %v2765 = vmul.f32 %v2754, %v1412
      %v2766 = vadd.f32 %v2726, %v2756
      %v2767 = vadd.f32 %v2727, %v2757
      %v2768 = vadd.f32 %v2728, %v2758
      %v2769 = vadd.f32 %v2729, %v2759
      %v2770 = vadd.f32 %v2730, %v2760
      %v2771 = vadd.f32 %v2731, %v2761
      %v2772 = vadd.f32 %v2732, %v2762
      %v2773 = vadd.f32 %v2733, %v2763
      %v2774 = vadd.f32 %v2734, %v2764
      %v2775 = vadd.f32 %v2735, %v2765
      %v2776 = vld [vmem:[%s21] sm:$0x1]
      %v2778 = vperm.slane %v2776, 0
      %v2780 = vadd.f32 %v2766, %v2778
      %v2781 = vadd.f32 %v2767, %v2778
      %v2782 = vadd.f32 %v2768, %v2778
      %v2783 = vadd.f32 %v2769, %v2778
      %v2784 = vadd.f32 %v2770, %v2778
      %v2785 = vadd.f32 %v2771, %v2778
      %v2786 = vadd.f32 %v2772, %v2778
      %v2787 = vadd.f32 %v2773, %v2778
      %v2788 = vadd.f32 %v2774, %v2778
      %v2789 = vadd.f32 %v2775, %v2778
      %2790 = vst [vmem:[%s738] sm:$0xff] %v2780
      %2791 = vst [vmem:[%s738 + $0x8] sm:$0xff] %v2781
      %2792 = vst [vmem:[%s738 + $0x10] sm:$0xff] %v2782
      %2793 = vst [vmem:[%s738 + $0x18] sm:$0xff] %v2783
      %2794 = vst [vmem:[%s738 + $0x20] sm:$0xff] %v2784
      %2795 = vst [vmem:[%s738 + $0x28] sm:$0xff] %v2785
      %2796 = vst [vmem:[%s738 + $0x30] sm:$0xff] %v2786
      %2797 = vst [vmem:[%s738 + $0x38] sm:$0xff] %v2787
      %2798 = vst [vmem:[%s738 + $0x40] sm:$0xff] %v2788
      %2799 = vst [vmem:[%s738 + $0x48] sm:$0xff] %v2789
      %p2800 = scmp.lt.s32.totalorder %s35, 1
      %s2801 = scalar_select %p2800, %s35, 1
      %s2802 = smul.addr %s2801, 8
      %s2803 = scalar_lea.vmem %s22, %s2802
      %p2804 = scmp.lt.s32.totalorder %s35, 1
      %s2805 = scalar_select %p2804, %s35, 1
      %s2806 = smul.addr %s2805, 10
      %s2807 = smul.addr %s2806, 8
      %s2808 = scalar_lea.vmem %s23, %s2807
      // Predicated region
      $region109: #{mimocom_forward.1} parent=107 // pred_check
        %p2809 = pneg %p525
      $region110: #{mimocom_forward.1} parent=107 // pred_check_branch
        %2811 = sbr.rel (%p2809) target = $region112
      $region111: #{mimocom_forward.1} parent=107 // pred_region
        _
      $region112: #{mimocom_forward.1} parent=107 // pred_fallthru
        _
      // Predicated region
      $region113: #{mimocom_forward.1} parent=107 // pred_check
        %p2812 = pneg %p551
      $region114: #{mimocom_forward.1} parent=107 // pred_check_branch
        %2814 = sbr.rel (%p2812) target = $region116
      $region115: #{mimocom_forward.1} parent=107 // pred_region
        _
      $region116: #{mimocom_forward.1} parent=107 // pred_fallthru
        _
    $region108: #{mimocom_forward.1} parent=5 // pred_fallthru
      _
    %p2815 = scmp.le.s32.totalorder 2, %s30
    // Predicated region
    $region117: #{mimocom_forward.1} parent=5 // pred_check
      %p2816 = pneg %p2815
    $region118: #{mimocom_forward.1} parent=5 // pred_check_branch
      %2818 = sbr.rel (%p2816) target = $region120
    $region119: #{mimocom_forward.1} parent=5 // pred_region
      %s2819 = ssub.s32 %s30, 2
      // Predicated region
      $region121: #{mimocom_forward.1} parent=119 // pred_check
        %p2820 = pneg %p531
      $region122: #{mimocom_forward.1} parent=119 // pred_check_branch
        %2822 = sbr.rel (%p2820) target = $region124
      $region123: #{mimocom_forward.1} parent=119 // pred_region
        %p2823 = scmp.lt.s32.totalorder %s36, 1
        %s2824 = scalar_select %p2823, %s36, 1
        %s2825 = smul.addr %s2824, 8
        %s2826 = scalar_lea.vmem %s22, %s2825
      $region124: #{mimocom_forward.1} parent=119 // pred_fallthru
        _
      // Predicated region
      $region125: #{mimocom_forward.1} parent=119 // pred_check
        %p2827 = pneg %p557
      $region126: #{mimocom_forward.1} parent=119 // pred_check_branch
        %2829 = sbr.rel (%p2827) target = $region128
      $region127: #{mimocom_forward.1} parent=119 // pred_region
        %p2830 = scmp.lt.s32.totalorder %s36, 1
        %s2831 = scalar_select %p2830, %s36, 1
        %s2832 = smul.addr %s2831, 10
        %s2833 = smul.addr %s2832, 8
        %s2834 = scalar_lea.vmem %s23, %s2833
      $region128: #{mimocom_forward.1} parent=119 // pred_fallthru
        _
    $region120: #{mimocom_forward.1} parent=5 // pred_fallthru
      _
  $region6: #{mimocom_forward.1} parent=0 // loop_footer
    %s34 = sadd.s32 1, %s30
  $region7: #{mimocom_forward.1} parent=0 // loop_footer_branch
    %29 = sbr.rel target = $region3
  $region8: #{mimocom_forward.1} parent=0 // loop_exit
    _

</llo_original>
